<compile_context>
chip_gen: v5e
topology: v5e:2x2
jax: 0.10.0
libtpu: 0.0.40
codegen_flags: <defaults>
</compile_context>

<pallas_src>
import functools

import numpy as np

import jax
import jax.numpy as jnp
from jax import lax
from jax.experimental import pallas as pl
from jax.experimental.pallas import tpu as pltpu


def _euler_kernel(dt, steps_per_interval, x0_ref, w1_ref, b1_ref, w2_ref,
                  b2_ref, out_ref):
    """Whole Euler trajectory in one kernel invocation.

    steps_per_interval: static tuple of Python ints, number of Euler sub-steps
    between consecutive requested output times (length T-1).
    x0_ref: (B, S*D) -- the kernel selects seq index 0 (first D lanes) itself.
    """
    B = x0_ref.shape[0]
    D, H = w1_ref.shape

    # Hoist weight loads + bias broadcasts out of the Euler loop (JAX does not
    # CSE broadcast_in_dim, so leaving them inside costs vld/VALU slots every
    # sub-step).  Fold dt into the second layer once so the per-step update is
    # x + (h @ (dt*W2) + dt*b2): one fewer dependent VPU multiply per step.
    w1 = w1_ref[...]
    b1 = jnp.broadcast_to(b1_ref[...], (B, H))
    w2_dt = w2_ref[...] * dt
    b2_dt = jnp.broadcast_to(b2_ref[...] * dt, (B, D))

    def step(_, x):
        # Two dependent MXU dots + EUP tanh are the serial critical path.
        # Dots stay at Mosaic's default f32 contraction (see header comment).
        h = jnp.tanh(jnp.dot(x, w1, preferred_element_type=jnp.float32) + b1)
        return x + (jnp.dot(h, w2_dt, preferred_element_type=jnp.float32)
                    + b2_dt)

    # Seq index 0 of the flattened input = first D lanes of the (B, S*D) slab.
    x = x0_ref[:, 0:D].astype(jnp.float32)
    out_ref[0, :, :] = x.astype(out_ref.dtype)

    for i, n in enumerate(steps_per_interval):
        if n > 0:
            # Static trip counts: fully unroll short intervals, chunk-unroll
            # long ones so the scheduler can interleave consecutive sub-steps.
            unroll = True if n <= 64 else 16
            x = lax.fori_loop(0, n, step, x, unroll=unroll)
        out_ref[i + 1, :, :] = x.astype(out_ref.dtype)


@functools.lru_cache(maxsize=None)
def _build_forward(steps, dt, B, S, C, F, H, dtype_name):
    """Build (once) and cache the jitted forward for a given schedule/shapes."""
    D = C * F
    T = len(steps) + 1
    out_dtype = jnp.dtype(dtype_name)

    euler = pl.pallas_call(
        functools.partial(_euler_kernel, float(dt), tuple(steps)),
        out_shape=jax.ShapeDtypeStruct((T, B, D), out_dtype),
        in_specs=[pl.BlockSpec(memory_space=pltpu.MemorySpace.VMEM)] * 5,
        out_specs=pl.BlockSpec(memory_space=pltpu.MemorySpace.VMEM),
    )

    @jax.jit
    def fwd(x0, w1, b1, w2, b2):
        # nn.Flatten(start_dim=-2): (B,S,C,F) -> (B, S*D) is a free bitcast;
        # the kernel selects seq index 0, so no pre-kernel XLA slice runs.
        x0_2d = x0.reshape(B, S * D)
        out_tbd = euler(x0_2d, w1, b1, w2, b2)            # (T, B, D)
        # .permute(1, 0, 2) + nn.Unflatten(-1, (C, F)): one tiny fused copy
        # inside this same jit (see header for why it is not done in-kernel).
        return jnp.transpose(out_tbd, (1, 0, 2)).reshape(B, T, C, F)

    return fwd


def _steps_from_times(t, dt):
    """Per-interval Euler sub-step counts (host-side, static)."""
    t_host = np.asarray(t, dtype=np.float64)   # pass host numpy to avoid a device sync
    steps = []
    for i in range(t_host.shape[0] - 1):
        delta = float(t_host[i + 1] - t_host[i])
        n = int(round(delta / dt))
        # TODO(synk): torchdiffeq's fixed-grid Euler linearly interpolates when a
        # requested time is off the dt grid; here we require grid-aligned times.
        if abs(n * dt - delta) > 1e-6 * max(1.0, abs(delta)):
            raise ValueError("requested output times must lie on the dt grid")
        steps.append(n)
    return tuple(steps)


def neural_ode_forward(x0, t, params, dt=0.001):
    """x0: (B, S, C, F) float32; t: host numpy (preferred) times on the dt grid."""
    B, S, C, F = x0.shape
    w1, b1, w2, b2 = params          # w1: (D,H), b1: (1,H), w2: (H,D), b2: (1,D)
    steps = _steps_from_times(t, dt)
    fwd = _build_forward(steps, float(dt), B, S, C, F, int(w1.shape[1]),
                         str(x0.dtype))
    return fwd(x0, w1, b1, w2, b2)


def init_params(key, in_channels, feature_dim, nhidden):
    """Deterministic init mirroring nn.Linear default (uniform +/-1/sqrt(fan_in)).

    Weights are stored already transposed to (in, out) so the kernel computes
    y = x @ W + b (equivalent to PyTorch's x @ weight.T + bias).
    """
    D = in_channels * feature_dim
    k1, k2, k3, k4 = jax.random.split(key, 4)
    lim1 = 1.0 / jnp.sqrt(D)
    lim2 = 1.0 / jnp.sqrt(nhidden)
    w1 = jax.random.uniform(k1, (D, nhidden), jnp.float32, -lim1, lim1)
    b1 = jax.random.uniform(k2, (1, nhidden), jnp.float32, -lim1, lim1)
    w2 = jax.random.uniform(k3, (nhidden, D), jnp.float32, -lim2, lim2)
    b2 = jax.random.uniform(k4, (1, D), jnp.float32, -lim2, lim2)
    return w1, b1, w2, b2


def _reference_forward(x0, t, params, dt=0.001):
    """Pure-JAX reference (same fixed-grid Euler semantics)."""
    B, S, C, F = x0.shape
    D = C * F
    w1, b1, w2, b2 = params
    x = x0.reshape(B, S, D)[:, 0].astype(jnp.float32)

    def func(x):
        return jnp.tanh(x @ w1 + b1) @ w2 + b2

    t_host = np.asarray(t, dtype=np.float64)
    outs = [x]
    for i in range(len(t_host) - 1):
        n = int(round(float(t_host[i + 1] - t_host[i]) / dt))
        for _ in range(n):
            x = x + dt * func(x)
        outs.append(x)
    out = jnp.stack(outs, axis=0)                     # (T, B, D)
    return jnp.transpose(out, (1, 0, 2)).reshape(B, len(t_host), C, F)


if __name__ == "__main__":
    # Small shapes consistent with the module.
    B, S, C, F = 2, 8, 4, 16      # x0: (batch, seq, in_channels, feature_dim)
    nhidden = 64
    dt = 0.001
    T = 5

    key = jax.random.PRNGKey(0)
    kx, kp = jax.random.split(key)
    x0 = jax.random.normal(kx, (B, S, C, F), dtype=jnp.float32)
    t = np.arange(T, dtype=np.float64) * 0.01   # host numpy; 10 Euler sub-steps / interval
    params = init_params(kp, C, F, nhidden)

    out = neural_ode_forward(x0, t, params, dt=dt)
    out = jax.block_until_ready(out)
    assert out.shape == (B, T, C, F), out.shape

    # Second call hits the lru_cache'd jitted wrapper: no retrace, no device sync.
    out2 = jax.block_until_ready(neural_ode_forward(x0, t, params, dt=dt))
    assert jnp.allclose(out, out2), "non-deterministic across cached calls"

    ref = _reference_forward(x0, t, params, dt=dt)
    assert jnp.allclose(out, ref, rtol=1e-4, atol=1e-5), "mismatch vs reference"

    print("KERNEL_OK")
</pallas_src>

<mosaic_0001>
module attributes {stable_mosaic.version = 11 : i64} {
  func.func @_euler_kernel(%arg0: memref<2x512xf32, #tpu.memory_space<vmem>>, %arg1: memref<64x64xf32, #tpu.memory_space<vmem>>, %arg2: memref<1x64xf32, #tpu.memory_space<vmem>>, %arg3: memref<64x64xf32, #tpu.memory_space<vmem>>, %arg4: memref<1x64xf32, #tpu.memory_space<vmem>>, %arg5: memref<5x2x64xf32, #tpu.memory_space<vmem>>) attributes {dimension_semantics = [], scalar_prefetch = 0 : i64, scratch_operands = 0 : i64, tpu.core_type = #tpu.core_type<tc>} {
    %c0 = arith.constant 0 : index
    %c0_0 = arith.constant 0 : index
    %0 = vector.load %arg1[%c0, %c0_0] : memref<64x64xf32, #tpu.memory_space<vmem>>, vector<64x64xf32>
    %c0_1 = arith.constant 0 : index
    %c0_2 = arith.constant 0 : index
    %1 = vector.load %arg2[%c0_1, %c0_2] : memref<1x64xf32, #tpu.memory_space<vmem>>, vector<1x64xf32>
    %2 = vector.shape_cast %1 : vector<1x64xf32> to vector<1x64xf32>
    %3 = vector.broadcast %2 : vector<1x64xf32> to vector<2x64xf32>
    %c0_3 = arith.constant 0 : index
    %c0_4 = arith.constant 0 : index
    %4 = vector.load %arg3[%c0_3, %c0_4] : memref<64x64xf32, #tpu.memory_space<vmem>>, vector<64x64xf32>
    %cst = arith.constant 1.000000e-03 : f32
    %5 = vector.broadcast %cst : f32 to vector<64x64xf32>
    %6 = arith.mulf %4, %5 : vector<64x64xf32>
    %c0_5 = arith.constant 0 : index
    %c0_6 = arith.constant 0 : index
    %7 = vector.load %arg4[%c0_5, %c0_6] : memref<1x64xf32, #tpu.memory_space<vmem>>, vector<1x64xf32>
    %cst_7 = arith.constant 1.000000e-03 : f32
    %8 = vector.broadcast %cst_7 : f32 to vector<1x64xf32>
    %9 = arith.mulf %7, %8 : vector<1x64xf32>
    %10 = vector.shape_cast %9 : vector<1x64xf32> to vector<1x64xf32>
    %11 = vector.broadcast %10 : vector<1x64xf32> to vector<2x64xf32>
    %c0_8 = arith.constant 0 : index
    %c0_9 = arith.constant 0 : index
    %12 = vector.load %arg0[%c0_8, %c0_9] : memref<2x512xf32, #tpu.memory_space<vmem>>, vector<2x64xf32>
    %c0_10 = arith.constant 0 : index
    %c0_11 = arith.constant 0 : index
    %c0_12 = arith.constant 0 : index
    %13 = vector.load %arg5[%c0_10, %c0_11, %c0_12] : memref<5x2x64xf32, #tpu.memory_space<vmem>>, vector<1x2x64xf32>
    %14 = vector.shape_cast %13 : vector<1x2x64xf32> to vector<2x64xf32>
    %15 = vector.shape_cast %12 : vector<2x64xf32> to vector<1x2x64xf32>
    tpu.vector_store %arg5[%c0_10, %c0_11, %c0_12], %15 {strides = array<i32>} : memref<5x2x64xf32, #tpu.memory_space<vmem>>, vector<1x2x64xf32>,
    %c0_i32 = arith.constant 0 : i32
    %cst_13 = arith.constant dense<0.000000e+00> : vector<2x64xf32>
    %16 = tpu.matmul %12, %0, %cst_13 {dimension_numbers = #tpu.dot_dimension_numbers<[1], [0], [0], [1], [0, 0, 1, 1], [], []>} : vector<2x64xf32>, vector<64x64xf32>, vector<2x64xf32> -> vector<2x64xf32>
    %17 = arith.addf %16, %3 : vector<2x64xf32>
    %18 = math.tanh %17 : vector<2x64xf32>
    %cst_14 = arith.constant dense<0.000000e+00> : vector<2x64xf32>
    %19 = tpu.matmul %18, %6, %cst_14 {dimension_numbers = #tpu.dot_dimension_numbers<[1], [0], [0], [1], [0, 0, 1, 1], [], []>} : vector<2x64xf32>, vector<64x64xf32>, vector<2x64xf32> -> vector<2x64xf32>
    %20 = arith.addf %19, %11 : vector<2x64xf32>
    %21 = arith.addf %12, %20 : vector<2x64xf32>
    %c1_i32 = arith.constant 1 : i32
    %cst_15 = arith.constant dense<0.000000e+00> : vector<2x64xf32>
    %22 = tpu.matmul %21, %0, %cst_15 {dimension_numbers = #tpu.dot_dimension_numbers<[1], [0], [0], [1], [0, 0, 1, 1], [], []>} : vector<2x64xf32>, vector<64x64xf32>, vector<2x64xf32> -> vector<2x64xf32>
    %23 = arith.addf %22, %3 : vector<2x64xf32>
    %24 = math.tanh %23 : vector<2x64xf32>
    %cst_16 = arith.constant dense<0.000000e+00> : vector<2x64xf32>
    %25 = tpu.matmul %24, %6, %cst_16 {dimension_numbers = #tpu.dot_dimension_numbers<[1], [0], [0], [1], [0, 0, 1, 1], [], []>} : vector<2x64xf32>, vector<64x64xf32>, vector<2x64xf32> -> vector<2x64xf32>
    %26 = arith.addf %25, %11 : vector<2x64xf32>
    %27 = arith.addf %21, %26 : vector<2x64xf32>
    %c2_i32 = arith.constant 2 : i32
    %cst_17 = arith.constant dense<0.000000e+00> : vector<2x64xf32>
    %28 = tpu.matmul %27, %0, %cst_17 {dimension_numbers = #tpu.dot_dimension_numbers<[1], [0], [0], [1], [0, 0, 1, 1], [], []>} : vector<2x64xf32>, vector<64x64xf32>, vector<2x64xf32> -> vector<2x64xf32>
    %29 = arith.addf %28, %3 : vector<2x64xf32>
    %30 = math.tanh %29 : vector<2x64xf32>
    %cst_18 = arith.constant dense<0.000000e+00> : vector<2x64xf32>
    %31 = tpu.matmul %30, %6, %cst_18 {dimension_numbers = #tpu.dot_dimension_numbers<[1], [0], [0], [1], [0, 0, 1, 1], [], []>} : vector<2x64xf32>, vector<64x64xf32>, vector<2x64xf32> -> vector<2x64xf32>
    %32 = arith.addf %31, %11 : vector<2x64xf32>
    %33 = arith.addf %27, %32 : vector<2x64xf32>
    %c3_i32 = arith.constant 3 : i32
    %cst_19 = arith.constant dense<0.000000e+00> : vector<2x64xf32>
    %34 = tpu.matmul %33, %0, %cst_19 {dimension_numbers = #tpu.dot_dimension_numbers<[1], [0], [0], [1], [0, 0, 1, 1], [], []>} : vector<2x64xf32>, vector<64x64xf32>, vector<2x64xf32> -> vector<2x64xf32>
    %35 = arith.addf %34, %3 : vector<2x64xf32>
    %36 = math.tanh %35 : vector<2x64xf32>
    %cst_20 = arith.constant dense<0.000000e+00> : vector<2x64xf32>
    %37 = tpu.matmul %36, %6, %cst_20 {dimension_numbers = #tpu.dot_dimension_numbers<[1], [0], [0], [1], [0, 0, 1, 1], [], []>} : vector<2x64xf32>, vector<64x64xf32>, vector<2x64xf32> -> vector<2x64xf32>
    %38 = arith.addf %37, %11 : vector<2x64xf32>
    %39 = arith.addf %33, %38 : vector<2x64xf32>
    %c4_i32 = arith.constant 4 : i32
    %cst_21 = arith.constant dense<0.000000e+00> : vector<2x64xf32>
    %40 = tpu.matmul %39, %0, %cst_21 {dimension_numbers = #tpu.dot_dimension_numbers<[1], [0], [0], [1], [0, 0, 1, 1], [], []>} : vector<2x64xf32>, vector<64x64xf32>, vector<2x64xf32> -> vector<2x64xf32>
    %41 = arith.addf %40, %3 : vector<2x64xf32>
    %42 = math.tanh %41 : vector<2x64xf32>
    %cst_22 = arith.constant dense<0.000000e+00> : vector<2x64xf32>
    %43 = tpu.matmul %42, %6, %cst_22 {dimension_numbers = #tpu.dot_dimension_numbers<[1], [0], [0], [1], [0, 0, 1, 1], [], []>} : vector<2x64xf32>, vector<64x64xf32>, vector<2x64xf32> -> vector<2x64xf32>
    %44 = arith.addf %43, %11 : vector<2x64xf32>
    %45 = arith.addf %39, %44 : vector<2x64xf32>
    %c5_i32 = arith.constant 5 : i32
    %cst_23 = arith.constant dense<0.000000e+00> : vector<2x64xf32>
    %46 = tpu.matmul %45, %0, %cst_23 {dimension_numbers = #tpu.dot_dimension_numbers<[1], [0], [0], [1], [0, 0, 1, 1], [], []>} : vector<2x64xf32>, vector<64x64xf32>, vector<2x64xf32> -> vector<2x64xf32>
    %47 = arith.addf %46, %3 : vector<2x64xf32>
    %48 = math.tanh %47 : vector<2x64xf32>
    %cst_24 = arith.constant dense<0.000000e+00> : vector<2x64xf32>
    %49 = tpu.matmul %48, %6, %cst_24 {dimension_numbers = #tpu.dot_dimension_numbers<[1], [0], [0], [1], [0, 0, 1, 1], [], []>} : vector<2x64xf32>, vector<64x64xf32>, vector<2x64xf32> -> vector<2x64xf32>
    %50 = arith.addf %49, %11 : vector<2x64xf32>
    %51 = arith.addf %45, %50 : vector<2x64xf32>
    %c6_i32 = arith.constant 6 : i32
    %cst_25 = arith.constant dense<0.000000e+00> : vector<2x64xf32>
    %52 = tpu.matmul %51, %0, %cst_25 {dimension_numbers = #tpu.dot_dimension_numbers<[1], [0], [0], [1], [0, 0, 1, 1], [], []>} : vector<2x64xf32>, vector<64x64xf32>, vector<2x64xf32> -> vector<2x64xf32>
    %53 = arith.addf %52, %3 : vector<2x64xf32>
    %54 = math.tanh %53 : vector<2x64xf32>
    %cst_26 = arith.constant dense<0.000000e+00> : vector<2x64xf32>
    %55 = tpu.matmul %54, %6, %cst_26 {dimension_numbers = #tpu.dot_dimension_numbers<[1], [0], [0], [1], [0, 0, 1, 1], [], []>} : vector<2x64xf32>, vector<64x64xf32>, vector<2x64xf32> -> vector<2x64xf32>
    %56 = arith.addf %55, %11 : vector<2x64xf32>
    %57 = arith.addf %51, %56 : vector<2x64xf32>
    %c7_i32 = arith.constant 7 : i32
    %cst_27 = arith.constant dense<0.000000e+00> : vector<2x64xf32>
    %58 = tpu.matmul %57, %0, %cst_27 {dimension_numbers = #tpu.dot_dimension_numbers<[1], [0], [0], [1], [0, 0, 1, 1], [], []>} : vector<2x64xf32>, vector<64x64xf32>, vector<2x64xf32> -> vector<2x64xf32>
    %59 = arith.addf %58, %3 : vector<2x64xf32>
    %60 = math.tanh %59 : vector<2x64xf32>
    %cst_28 = arith.constant dense<0.000000e+00> : vector<2x64xf32>
    %61 = tpu.matmul %60, %6, %cst_28 {dimension_numbers = #tpu.dot_dimension_numbers<[1], [0], [0], [1], [0, 0, 1, 1], [], []>} : vector<2x64xf32>, vector<64x64xf32>, vector<2x64xf32> -> vector<2x64xf32>
    %62 = arith.addf %61, %11 : vector<2x64xf32>
    %63 = arith.addf %57, %62 : vector<2x64xf32>
    %c8_i32 = arith.constant 8 : i32
    %cst_29 = arith.constant dense<0.000000e+00> : vector<2x64xf32>
    %64 = tpu.matmul %63, %0, %cst_29 {dimension_numbers = #tpu.dot_dimension_numbers<[1], [0], [0], [1], [0, 0, 1, 1], [], []>} : vector<2x64xf32>, vector<64x64xf32>, vector<2x64xf32> -> vector<2x64xf32>
    %65 = arith.addf %64, %3 : vector<2x64xf32>
    %66 = math.tanh %65 : vector<2x64xf32>
    %cst_30 = arith.constant dense<0.000000e+00> : vector<2x64xf32>
    %67 = tpu.matmul %66, %6, %cst_30 {dimension_numbers = #tpu.dot_dimension_numbers<[1], [0], [0], [1], [0, 0, 1, 1], [], []>} : vector<2x64xf32>, vector<64x64xf32>, vector<2x64xf32> -> vector<2x64xf32>
    %68 = arith.addf %67, %11 : vector<2x64xf32>
    %69 = arith.addf %63, %68 : vector<2x64xf32>
    %c9_i32 = arith.constant 9 : i32
    %cst_31 = arith.constant dense<0.000000e+00> : vector<2x64xf32>
    %70 = tpu.matmul %69, %0, %cst_31 {dimension_numbers = #tpu.dot_dimension_numbers<[1], [0], [0], [1], [0, 0, 1, 1], [], []>} : vector<2x64xf32>, vector<64x64xf32>, vector<2x64xf32> -> vector<2x64xf32>
    %71 = arith.addf %70, %3 : vector<2x64xf32>
    %72 = math.tanh %71 : vector<2x64xf32>
    %cst_32 = arith.constant dense<0.000000e+00> : vector<2x64xf32>
    %73 = tpu.matmul %72, %6, %cst_32 {dimension_numbers = #tpu.dot_dimension_numbers<[1], [0], [0], [1], [0, 0, 1, 1], [], []>} : vector<2x64xf32>, vector<64x64xf32>, vector<2x64xf32> -> vector<2x64xf32>
    %74 = arith.addf %73, %11 : vector<2x64xf32>
    %75 = arith.addf %69, %74 : vector<2x64xf32>
    %c1 = arith.constant 1 : index
    %c0_33 = arith.constant 0 : index
    %c0_34 = arith.constant 0 : index
    %76 = vector.load %arg5[%c1, %c0_33, %c0_34] : memref<5x2x64xf32, #tpu.memory_space<vmem>>, vector<1x2x64xf32>
    %77 = vector.shape_cast %76 : vector<1x2x64xf32> to vector<2x64xf32>
    %78 = vector.shape_cast %75 : vector<2x64xf32> to vector<1x2x64xf32>
    tpu.vector_store %arg5[%c1, %c0_33, %c0_34], %78 {strides = array<i32>} : memref<5x2x64xf32, #tpu.memory_space<vmem>>, vector<1x2x64xf32>,
    %c0_i32_35 = arith.constant 0 : i32
    %cst_36 = arith.constant dense<0.000000e+00> : vector<2x64xf32>
    %79 = tpu.matmul %75, %0, %cst_36 {dimension_numbers = #tpu.dot_dimension_numbers<[1], [0], [0], [1], [0, 0, 1, 1], [], []>} : vector<2x64xf32>, vector<64x64xf32>, vector<2x64xf32> -> vector<2x64xf32>
    %80 = arith.addf %79, %3 : vector<2x64xf32>
    %81 = math.tanh %80 : vector<2x64xf32>
    %cst_37 = arith.constant dense<0.000000e+00> : vector<2x64xf32>
    %82 = tpu.matmul %81, %6, %cst_37 {dimension_numbers = #tpu.dot_dimension_numbers<[1], [0], [0], [1], [0, 0, 1, 1], [], []>} : vector<2x64xf32>, vector<64x64xf32>, vector<2x64xf32> -> vector<2x64xf32>
    %83 = arith.addf %82, %11 : vector<2x64xf32>
    %84 = arith.addf %75, %83 : vector<2x64xf32>
    %c1_i32_38 = arith.constant 1 : i32
    %cst_39 = arith.constant dense<0.000000e+00> : vector<2x64xf32>
    %85 = tpu.matmul %84, %0, %cst_39 {dimension_numbers = #tpu.dot_dimension_numbers<[1], [0], [0], [1], [0, 0, 1, 1], [], []>} : vector<2x64xf32>, vector<64x64xf32>, vector<2x64xf32> -> vector<2x64xf32>
    %86 = arith.addf %85, %3 : vector<2x64xf32>
    %87 = math.tanh %86 : vector<2x64xf32>
    %cst_40 = arith.constant dense<0.000000e+00> : vector<2x64xf32>
    %88 = tpu.matmul %87, %6, %cst_40 {dimension_numbers = #tpu.dot_dimension_numbers<[1], [0], [0], [1], [0, 0, 1, 1], [], []>} : vector<2x64xf32>, vector<64x64xf32>, vector<2x64xf32> -> vector<2x64xf32>
    %89 = arith.addf %88, %11 : vector<2x64xf32>
    %90 = arith.addf %84, %89 : vector<2x64xf32>
    %c2_i32_41 = arith.constant 2 : i32
    %cst_42 = arith.constant dense<0.000000e+00> : vector<2x64xf32>
    %91 = tpu.matmul %90, %0, %cst_42 {dimension_numbers = #tpu.dot_dimension_numbers<[1], [0], [0], [1], [0, 0, 1, 1], [], []>} : vector<2x64xf32>, vector<64x64xf32>, vector<2x64xf32> -> vector<2x64xf32>
    %92 = arith.addf %91, %3 : vector<2x64xf32>
    %93 = math.tanh %92 : vector<2x64xf32>
    %cst_43 = arith.constant dense<0.000000e+00> : vector<2x64xf32>
    %94 = tpu.matmul %93, %6, %cst_43 {dimension_numbers = #tpu.dot_dimension_numbers<[1], [0], [0], [1], [0, 0, 1, 1], [], []>} : vector<2x64xf32>, vector<64x64xf32>, vector<2x64xf32> -> vector<2x64xf32>
    %95 = arith.addf %94, %11 : vector<2x64xf32>
    %96 = arith.addf %90, %95 : vector<2x64xf32>
    %c3_i32_44 = arith.constant 3 : i32
    %cst_45 = arith.constant dense<0.000000e+00> : vector<2x64xf32>
    %97 = tpu.matmul %96, %0, %cst_45 {dimension_numbers = #tpu.dot_dimension_numbers<[1], [0], [0], [1], [0, 0, 1, 1], [], []>} : vector<2x64xf32>, vector<64x64xf32>, vector<2x64xf32> -> vector<2x64xf32>
    %98 = arith.addf %97, %3 : vector<2x64xf32>
    %99 = math.tanh %98 : vector<2x64xf32>
    %cst_46 = arith.constant dense<0.000000e+00> : vector<2x64xf32>
    %100 = tpu.matmul %99, %6, %cst_46 {dimension_numbers = #tpu.dot_dimension_numbers<[1], [0], [0], [1], [0, 0, 1, 1], [], []>} : vector<2x64xf32>, vector<64x64xf32>, vector<2x64xf32> -> vector<2x64xf32>
    %101 = arith.addf %100, %11 : vector<2x64xf32>
    %102 = arith.addf %96, %101 : vector<2x64xf32>
    %c4_i32_47 = arith.constant 4 : i32
    %cst_48 = arith.constant dense<0.000000e+00> : vector<2x64xf32>
    %103 = tpu.matmul %102, %0, %cst_48 {dimension_numbers = #tpu.dot_dimension_numbers<[1], [0], [0], [1], [0, 0, 1, 1], [], []>} : vector<2x64xf32>, vector<64x64xf32>, vector<2x64xf32> -> vector<2x64xf32>
    %104 = arith.addf %103, %3 : vector<2x64xf32>
    %105 = math.tanh %104 : vector<2x64xf32>
    %cst_49 = arith.constant dense<0.000000e+00> : vector<2x64xf32>
    %106 = tpu.matmul %105, %6, %cst_49 {dimension_numbers = #tpu.dot_dimension_numbers<[1], [0], [0], [1], [0, 0, 1, 1], [], []>} : vector<2x64xf32>, vector<64x64xf32>, vector<2x64xf32> -> vector<2x64xf32>
    %107 = arith.addf %106, %11 : vector<2x64xf32>
    %108 = arith.addf %102, %107 : vector<2x64xf32>
    %c5_i32_50 = arith.constant 5 : i32
    %cst_51 = arith.constant dense<0.000000e+00> : vector<2x64xf32>
    %109 = tpu.matmul %108, %0, %cst_51 {dimension_numbers = #tpu.dot_dimension_numbers<[1], [0], [0], [1], [0, 0, 1, 1], [], []>} : vector<2x64xf32>, vector<64x64xf32>, vector<2x64xf32> -> vector<2x64xf32>
    %110 = arith.addf %109, %3 : vector<2x64xf32>
    %111 = math.tanh %110 : vector<2x64xf32>
    %cst_52 = arith.constant dense<0.000000e+00> : vector<2x64xf32>
    %112 = tpu.matmul %111, %6, %cst_52 {dimension_numbers = #tpu.dot_dimension_numbers<[1], [0], [0], [1], [0, 0, 1, 1], [], []>} : vector<2x64xf32>, vector<64x64xf32>, vector<2x64xf32> -> vector<2x64xf32>
    %113 = arith.addf %112, %11 : vector<2x64xf32>
    %114 = arith.addf %108, %113 : vector<2x64xf32>
    %c6_i32_53 = arith.constant 6 : i32
    %cst_54 = arith.constant dense<0.000000e+00> : vector<2x64xf32>
    %115 = tpu.matmul %114, %0, %cst_54 {dimension_numbers = #tpu.dot_dimension_numbers<[1], [0], [0], [1], [0, 0, 1, 1], [], []>} : vector<2x64xf32>, vector<64x64xf32>, vector<2x64xf32> -> vector<2x64xf32>
    %116 = arith.addf %115, %3 : vector<2x64xf32>
    %117 = math.tanh %116 : vector<2x64xf32>
    %cst_55 = arith.constant dense<0.000000e+00> : vector<2x64xf32>
    %118 = tpu.matmul %117, %6, %cst_55 {dimension_numbers = #tpu.dot_dimension_numbers<[1], [0], [0], [1], [0, 0, 1, 1], [], []>} : vector<2x64xf32>, vector<64x64xf32>, vector<2x64xf32> -> vector<2x64xf32>
    %119 = arith.addf %118, %11 : vector<2x64xf32>
    %120 = arith.addf %114, %119 : vector<2x64xf32>
    %c7_i32_56 = arith.constant 7 : i32
    %cst_57 = arith.constant dense<0.000000e+00> : vector<2x64xf32>
    %121 = tpu.matmul %120, %0, %cst_57 {dimension_numbers = #tpu.dot_dimension_numbers<[1], [0], [0], [1], [0, 0, 1, 1], [], []>} : vector<2x64xf32>, vector<64x64xf32>, vector<2x64xf32> -> vector<2x64xf32>
    %122 = arith.addf %121, %3 : vector<2x64xf32>
    %123 = math.tanh %122 : vector<2x64xf32>
    %cst_58 = arith.constant dense<0.000000e+00> : vector<2x64xf32>
    %124 = tpu.matmul %123, %6, %cst_58 {dimension_numbers = #tpu.dot_dimension_numbers<[1], [0], [0], [1], [0, 0, 1, 1], [], []>} : vector<2x64xf32>, vector<64x64xf32>, vector<2x64xf32> -> vector<2x64xf32>
    %125 = arith.addf %124, %11 : vector<2x64xf32>
    %126 = arith.addf %120, %125 : vector<2x64xf32>
    %c8_i32_59 = arith.constant 8 : i32
    %cst_60 = arith.constant dense<0.000000e+00> : vector<2x64xf32>
    %127 = tpu.matmul %126, %0, %cst_60 {dimension_numbers = #tpu.dot_dimension_numbers<[1], [0], [0], [1], [0, 0, 1, 1], [], []>} : vector<2x64xf32>, vector<64x64xf32>, vector<2x64xf32> -> vector<2x64xf32>
    %128 = arith.addf %127, %3 : vector<2x64xf32>
    %129 = math.tanh %128 : vector<2x64xf32>
    %cst_61 = arith.constant dense<0.000000e+00> : vector<2x64xf32>
    %130 = tpu.matmul %129, %6, %cst_61 {dimension_numbers = #tpu.dot_dimension_numbers<[1], [0], [0], [1], [0, 0, 1, 1], [], []>} : vector<2x64xf32>, vector<64x64xf32>, vector<2x64xf32> -> vector<2x64xf32>
    %131 = arith.addf %130, %11 : vector<2x64xf32>
    %132 = arith.addf %126, %131 : vector<2x64xf32>
    %c9_i32_62 = arith.constant 9 : i32
    %cst_63 = arith.constant dense<0.000000e+00> : vector<2x64xf32>
    %133 = tpu.matmul %132, %0, %cst_63 {dimension_numbers = #tpu.dot_dimension_numbers<[1], [0], [0], [1], [0, 0, 1, 1], [], []>} : vector<2x64xf32>, vector<64x64xf32>, vector<2x64xf32> -> vector<2x64xf32>
    %134 = arith.addf %133, %3 : vector<2x64xf32>
    %135 = math.tanh %134 : vector<2x64xf32>
    %cst_64 = arith.constant dense<0.000000e+00> : vector<2x64xf32>
    %136 = tpu.matmul %135, %6, %cst_64 {dimension_numbers = #tpu.dot_dimension_numbers<[1], [0], [0], [1], [0, 0, 1, 1], [], []>} : vector<2x64xf32>, vector<64x64xf32>, vector<2x64xf32> -> vector<2x64xf32>
    %137 = arith.addf %136, %11 : vector<2x64xf32>
    %138 = arith.addf %132, %137 : vector<2x64xf32>
    %c2 = arith.constant 2 : index
    %c0_65 = arith.constant 0 : index
    %c0_66 = arith.constant 0 : index
    %139 = vector.load %arg5[%c2, %c0_65, %c0_66] : memref<5x2x64xf32, #tpu.memory_space<vmem>>, vector<1x2x64xf32>
    %140 = vector.shape_cast %139 : vector<1x2x64xf32> to vector<2x64xf32>
    %141 = vector.shape_cast %138 : vector<2x64xf32> to vector<1x2x64xf32>
    tpu.vector_store %arg5[%c2, %c0_65, %c0_66], %141 {strides = array<i32>} : memref<5x2x64xf32, #tpu.memory_space<vmem>>, vector<1x2x64xf32>,
    %c0_i32_67 = arith.constant 0 : i32
    %cst_68 = arith.constant dense<0.000000e+00> : vector<2x64xf32>
    %142 = tpu.matmul %138, %0, %cst_68 {dimension_numbers = #tpu.dot_dimension_numbers<[1], [0], [0], [1], [0, 0, 1, 1], [], []>} : vector<2x64xf32>, vector<64x64xf32>, vector<2x64xf32> -> vector<2x64xf32>
    %143 = arith.addf %142, %3 : vector<2x64xf32>
    %144 = math.tanh %143 : vector<2x64xf32>
    %cst_69 = arith.constant dense<0.000000e+00> : vector<2x64xf32>
    %145 = tpu.matmul %144, %6, %cst_69 {dimension_numbers = #tpu.dot_dimension_numbers<[1], [0], [0], [1], [0, 0, 1, 1], [], []>} : vector<2x64xf32>, vector<64x64xf32>, vector<2x64xf32> -> vector<2x64xf32>
    %146 = arith.addf %145, %11 : vector<2x64xf32>
    %147 = arith.addf %138, %146 : vector<2x64xf32>
    %c1_i32_70 = arith.constant 1 : i32
    %cst_71 = arith.constant dense<0.000000e+00> : vector<2x64xf32>
    %148 = tpu.matmul %147, %0, %cst_71 {dimension_numbers = #tpu.dot_dimension_numbers<[1], [0], [0], [1], [0, 0, 1, 1], [], []>} : vector<2x64xf32>, vector<64x64xf32>, vector<2x64xf32> -> vector<2x64xf32>
    %149 = arith.addf %148, %3 : vector<2x64xf32>
    %150 = math.tanh %149 : vector<2x64xf32>
    %cst_72 = arith.constant dense<0.000000e+00> : vector<2x64xf32>
    %151 = tpu.matmul %150, %6, %cst_72 {dimension_numbers = #tpu.dot_dimension_numbers<[1], [0], [0], [1], [0, 0, 1, 1], [], []>} : vector<2x64xf32>, vector<64x64xf32>, vector<2x64xf32> -> vector<2x64xf32>
    %152 = arith.addf %151, %11 : vector<2x64xf32>
    %153 = arith.addf %147, %152 : vector<2x64xf32>
    %c2_i32_73 = arith.constant 2 : i32
    %cst_74 = arith.constant dense<0.000000e+00> : vector<2x64xf32>
    %154 = tpu.matmul %153, %0, %cst_74 {dimension_numbers = #tpu.dot_dimension_numbers<[1], [0], [0], [1], [0, 0, 1, 1], [], []>} : vector<2x64xf32>, vector<64x64xf32>, vector<2x64xf32> -> vector<2x64xf32>
    %155 = arith.addf %154, %3 : vector<2x64xf32>
    %156 = math.tanh %155 : vector<2x64xf32>
    %cst_75 = arith.constant dense<0.000000e+00> : vector<2x64xf32>
    %157 = tpu.matmul %156, %6, %cst_75 {dimension_numbers = #tpu.dot_dimension_numbers<[1], [0], [0], [1], [0, 0, 1, 1], [], []>} : vector<2x64xf32>, vector<64x64xf32>, vector<2x64xf32> -> vector<2x64xf32>
    %158 = arith.addf %157, %11 : vector<2x64xf32>
    %159 = arith.addf %153, %158 : vector<2x64xf32>
    %c3_i32_76 = arith.constant 3 : i32
    %cst_77 = arith.constant dense<0.000000e+00> : vector<2x64xf32>
    %160 = tpu.matmul %159, %0, %cst_77 {dimension_numbers = #tpu.dot_dimension_numbers<[1], [0], [0], [1], [0, 0, 1, 1], [], []>} : vector<2x64xf32>, vector<64x64xf32>, vector<2x64xf32> -> vector<2x64xf32>
    %161 = arith.addf %160, %3 : vector<2x64xf32>
    %162 = math.tanh %161 : vector<2x64xf32>
    %cst_78 = arith.constant dense<0.000000e+00> : vector<2x64xf32>
    %163 = tpu.matmul %162, %6, %cst_78 {dimension_numbers = #tpu.dot_dimension_numbers<[1], [0], [0], [1], [0, 0, 1, 1], [], []>} : vector<2x64xf32>, vector<64x64xf32>, vector<2x64xf32> -> vector<2x64xf32>
    %164 = arith.addf %163, %11 : vector<2x64xf32>
    %165 = arith.addf %159, %164 : vector<2x64xf32>
    %c4_i32_79 = arith.constant 4 : i32
    %cst_80 = arith.constant dense<0.000000e+00> : vector<2x64xf32>
    %166 = tpu.matmul %165, %0, %cst_80 {dimension_numbers = #tpu.dot_dimension_numbers<[1], [0], [0], [1], [0, 0, 1, 1], [], []>} : vector<2x64xf32>, vector<64x64xf32>, vector<2x64xf32> -> vector<2x64xf32>
    %167 = arith.addf %166, %3 : vector<2x64xf32>
    %168 = math.tanh %167 : vector<2x64xf32>
    %cst_81 = arith.constant dense<0.000000e+00> : vector<2x64xf32>
    %169 = tpu.matmul %168, %6, %cst_81 {dimension_numbers = #tpu.dot_dimension_numbers<[1], [0], [0], [1], [0, 0, 1, 1], [], []>} : vector<2x64xf32>, vector<64x64xf32>, vector<2x64xf32> -> vector<2x64xf32>
    %170 = arith.addf %169, %11 : vector<2x64xf32>
    %171 = arith.addf %165, %170 : vector<2x64xf32>
    %c5_i32_82 = arith.constant 5 : i32
    %cst_83 = arith.constant dense<0.000000e+00> : vector<2x64xf32>
    %172 = tpu.matmul %171, %0, %cst_83 {dimension_numbers = #tpu.dot_dimension_numbers<[1], [0], [0], [1], [0, 0, 1, 1], [], []>} : vector<2x64xf32>, vector<64x64xf32>, vector<2x64xf32> -> vector<2x64xf32>
    %173 = arith.addf %172, %3 : vector<2x64xf32>
    %174 = math.tanh %173 : vector<2x64xf32>
    %cst_84 = arith.constant dense<0.000000e+00> : vector<2x64xf32>
    %175 = tpu.matmul %174, %6, %cst_84 {dimension_numbers = #tpu.dot_dimension_numbers<[1], [0], [0], [1], [0, 0, 1, 1], [], []>} : vector<2x64xf32>, vector<64x64xf32>, vector<2x64xf32> -> vector<2x64xf32>
    %176 = arith.addf %175, %11 : vector<2x64xf32>
    %177 = arith.addf %171, %176 : vector<2x64xf32>
    %c6_i32_85 = arith.constant 6 : i32
    %cst_86 = arith.constant dense<0.000000e+00> : vector<2x64xf32>
    %178 = tpu.matmul %177, %0, %cst_86 {dimension_numbers = #tpu.dot_dimension_numbers<[1], [0], [0], [1], [0, 0, 1, 1], [], []>} : vector<2x64xf32>, vector<64x64xf32>, vector<2x64xf32> -> vector<2x64xf32>
    %179 = arith.addf %178, %3 : vector<2x64xf32>
    %180 = math.tanh %179 : vector<2x64xf32>
    %cst_87 = arith.constant dense<0.000000e+00> : vector<2x64xf32>
    %181 = tpu.matmul %180, %6, %cst_87 {dimension_numbers = #tpu.dot_dimension_numbers<[1], [0], [0], [1], [0, 0, 1, 1], [], []>} : vector<2x64xf32>, vector<64x64xf32>, vector<2x64xf32> -> vector<2x64xf32>
    %182 = arith.addf %181, %11 : vector<2x64xf32>
    %183 = arith.addf %177, %182 : vector<2x64xf32>
    %c7_i32_88 = arith.constant 7 : i32
    %cst_89 = arith.constant dense<0.000000e+00> : vector<2x64xf32>
    %184 = tpu.matmul %183, %0, %cst_89 {dimension_numbers = #tpu.dot_dimension_numbers<[1], [0], [0], [1], [0, 0, 1, 1], [], []>} : vector<2x64xf32>, vector<64x64xf32>, vector<2x64xf32> -> vector<2x64xf32>
    %185 = arith.addf %184, %3 : vector<2x64xf32>
    %186 = math.tanh %185 : vector<2x64xf32>
    %cst_90 = arith.constant dense<0.000000e+00> : vector<2x64xf32>
    %187 = tpu.matmul %186, %6, %cst_90 {dimension_numbers = #tpu.dot_dimension_numbers<[1], [0], [0], [1], [0, 0, 1, 1], [], []>} : vector<2x64xf32>, vector<64x64xf32>, vector<2x64xf32> -> vector<2x64xf32>
    %188 = arith.addf %187, %11 : vector<2x64xf32>
    %189 = arith.addf %183, %188 : vector<2x64xf32>
    %c8_i32_91 = arith.constant 8 : i32
    %cst_92 = arith.constant dense<0.000000e+00> : vector<2x64xf32>
    %190 = tpu.matmul %189, %0, %cst_92 {dimension_numbers = #tpu.dot_dimension_numbers<[1], [0], [0], [1], [0, 0, 1, 1], [], []>} : vector<2x64xf32>, vector<64x64xf32>, vector<2x64xf32> -> vector<2x64xf32>
    %191 = arith.addf %190, %3 : vector<2x64xf32>
    %192 = math.tanh %191 : vector<2x64xf32>
    %cst_93 = arith.constant dense<0.000000e+00> : vector<2x64xf32>
    %193 = tpu.matmul %192, %6, %cst_93 {dimension_numbers = #tpu.dot_dimension_numbers<[1], [0], [0], [1], [0, 0, 1, 1], [], []>} : vector<2x64xf32>, vector<64x64xf32>, vector<2x64xf32> -> vector<2x64xf32>
    %194 = arith.addf %193, %11 : vector<2x64xf32>
    %195 = arith.addf %189, %194 : vector<2x64xf32>
    %c9_i32_94 = arith.constant 9 : i32
    %cst_95 = arith.constant dense<0.000000e+00> : vector<2x64xf32>
    %196 = tpu.matmul %195, %0, %cst_95 {dimension_numbers = #tpu.dot_dimension_numbers<[1], [0], [0], [1], [0, 0, 1, 1], [], []>} : vector<2x64xf32>, vector<64x64xf32>, vector<2x64xf32> -> vector<2x64xf32>
    %197 = arith.addf %196, %3 : vector<2x64xf32>
    %198 = math.tanh %197 : vector<2x64xf32>
    %cst_96 = arith.constant dense<0.000000e+00> : vector<2x64xf32>
    %199 = tpu.matmul %198, %6, %cst_96 {dimension_numbers = #tpu.dot_dimension_numbers<[1], [0], [0], [1], [0, 0, 1, 1], [], []>} : vector<2x64xf32>, vector<64x64xf32>, vector<2x64xf32> -> vector<2x64xf32>
    %200 = arith.addf %199, %11 : vector<2x64xf32>
    %201 = arith.addf %195, %200 : vector<2x64xf32>
    %c3 = arith.constant 3 : index
    %c0_97 = arith.constant 0 : index
    %c0_98 = arith.constant 0 : index
    %202 = vector.load %arg5[%c3, %c0_97, %c0_98] : memref<5x2x64xf32, #tpu.memory_space<vmem>>, vector<1x2x64xf32>
    %203 = vector.shape_cast %202 : vector<1x2x64xf32> to vector<2x64xf32>
    %204 = vector.shape_cast %201 : vector<2x64xf32> to vector<1x2x64xf32>
    tpu.vector_store %arg5[%c3, %c0_97, %c0_98], %204 {strides = array<i32>} : memref<5x2x64xf32, #tpu.memory_space<vmem>>, vector<1x2x64xf32>,
    %c0_i32_99 = arith.constant 0 : i32
    %cst_100 = arith.constant dense<0.000000e+00> : vector<2x64xf32>
    %205 = tpu.matmul %201, %0, %cst_100 {dimension_numbers = #tpu.dot_dimension_numbers<[1], [0], [0], [1], [0, 0, 1, 1], [], []>} : vector<2x64xf32>, vector<64x64xf32>, vector<2x64xf32> -> vector<2x64xf32>
    %206 = arith.addf %205, %3 : vector<2x64xf32>
    %207 = math.tanh %206 : vector<2x64xf32>
    %cst_101 = arith.constant dense<0.000000e+00> : vector<2x64xf32>
    %208 = tpu.matmul %207, %6, %cst_101 {dimension_numbers = #tpu.dot_dimension_numbers<[1], [0], [0], [1], [0, 0, 1, 1], [], []>} : vector<2x64xf32>, vector<64x64xf32>, vector<2x64xf32> -> vector<2x64xf32>
    %209 = arith.addf %208, %11 : vector<2x64xf32>
    %210 = arith.addf %201, %209 : vector<2x64xf32>
    %c1_i32_102 = arith.constant 1 : i32
    %cst_103 = arith.constant dense<0.000000e+00> : vector<2x64xf32>
    %211 = tpu.matmul %210, %0, %cst_103 {dimension_numbers = #tpu.dot_dimension_numbers<[1], [0], [0], [1], [0, 0, 1, 1], [], []>} : vector<2x64xf32>, vector<64x64xf32>, vector<2x64xf32> -> vector<2x64xf32>
    %212 = arith.addf %211, %3 : vector<2x64xf32>
    %213 = math.tanh %212 : vector<2x64xf32>
    %cst_104 = arith.constant dense<0.000000e+00> : vector<2x64xf32>
    %214 = tpu.matmul %213, %6, %cst_104 {dimension_numbers = #tpu.dot_dimension_numbers<[1], [0], [0], [1], [0, 0, 1, 1], [], []>} : vector<2x64xf32>, vector<64x64xf32>, vector<2x64xf32> -> vector<2x64xf32>
    %215 = arith.addf %214, %11 : vector<2x64xf32>
    %216 = arith.addf %210, %215 : vector<2x64xf32>
    %c2_i32_105 = arith.constant 2 : i32
    %cst_106 = arith.constant dense<0.000000e+00> : vector<2x64xf32>
    %217 = tpu.matmul %216, %0, %cst_106 {dimension_numbers = #tpu.dot_dimension_numbers<[1], [0], [0], [1], [0, 0, 1, 1], [], []>} : vector<2x64xf32>, vector<64x64xf32>, vector<2x64xf32> -> vector<2x64xf32>
    %218 = arith.addf %217, %3 : vector<2x64xf32>
    %219 = math.tanh %218 : vector<2x64xf32>
    %cst_107 = arith.constant dense<0.000000e+00> : vector<2x64xf32>
    %220 = tpu.matmul %219, %6, %cst_107 {dimension_numbers = #tpu.dot_dimension_numbers<[1], [0], [0], [1], [0, 0, 1, 1], [], []>} : vector<2x64xf32>, vector<64x64xf32>, vector<2x64xf32> -> vector<2x64xf32>
    %221 = arith.addf %220, %11 : vector<2x64xf32>
    %222 = arith.addf %216, %221 : vector<2x64xf32>
    %c3_i32_108 = arith.constant 3 : i32
    %cst_109 = arith.constant dense<0.000000e+00> : vector<2x64xf32>
    %223 = tpu.matmul %222, %0, %cst_109 {dimension_numbers = #tpu.dot_dimension_numbers<[1], [0], [0], [1], [0, 0, 1, 1], [], []>} : vector<2x64xf32>, vector<64x64xf32>, vector<2x64xf32> -> vector<2x64xf32>
    %224 = arith.addf %223, %3 : vector<2x64xf32>
    %225 = math.tanh %224 : vector<2x64xf32>
    %cst_110 = arith.constant dense<0.000000e+00> : vector<2x64xf32>
    %226 = tpu.matmul %225, %6, %cst_110 {dimension_numbers = #tpu.dot_dimension_numbers<[1], [0], [0], [1], [0, 0, 1, 1], [], []>} : vector<2x64xf32>, vector<64x64xf32>, vector<2x64xf32> -> vector<2x64xf32>
    %227 = arith.addf %226, %11 : vector<2x64xf32>
    %228 = arith.addf %222, %227 : vector<2x64xf32>
    %c4_i32_111 = arith.constant 4 : i32
    %cst_112 = arith.constant dense<0.000000e+00> : vector<2x64xf32>
    %229 = tpu.matmul %228, %0, %cst_112 {dimension_numbers = #tpu.dot_dimension_numbers<[1], [0], [0], [1], [0, 0, 1, 1], [], []>} : vector<2x64xf32>, vector<64x64xf32>, vector<2x64xf32> -> vector<2x64xf32>
    %230 = arith.addf %229, %3 : vector<2x64xf32>
    %231 = math.tanh %230 : vector<2x64xf32>
    %cst_113 = arith.constant dense<0.000000e+00> : vector<2x64xf32>
    %232 = tpu.matmul %231, %6, %cst_113 {dimension_numbers = #tpu.dot_dimension_numbers<[1], [0], [0], [1], [0, 0, 1, 1], [], []>} : vector<2x64xf32>, vector<64x64xf32>, vector<2x64xf32> -> vector<2x64xf32>
    %233 = arith.addf %232, %11 : vector<2x64xf32>
    %234 = arith.addf %228, %233 : vector<2x64xf32>
    %c5_i32_114 = arith.constant 5 : i32
    %cst_115 = arith.constant dense<0.000000e+00> : vector<2x64xf32>
    %235 = tpu.matmul %234, %0, %cst_115 {dimension_numbers = #tpu.dot_dimension_numbers<[1], [0], [0], [1], [0, 0, 1, 1], [], []>} : vector<2x64xf32>, vector<64x64xf32>, vector<2x64xf32> -> vector<2x64xf32>
    %236 = arith.addf %235, %3 : vector<2x64xf32>
    %237 = math.tanh %236 : vector<2x64xf32>
    %cst_116 = arith.constant dense<0.000000e+00> : vector<2x64xf32>
    %238 = tpu.matmul %237, %6, %cst_116 {dimension_numbers = #tpu.dot_dimension_numbers<[1], [0], [0], [1], [0, 0, 1, 1], [], []>} : vector<2x64xf32>, vector<64x64xf32>, vector<2x64xf32> -> vector<2x64xf32>
    %239 = arith.addf %238, %11 : vector<2x64xf32>
    %240 = arith.addf %234, %239 : vector<2x64xf32>
    %c6_i32_117 = arith.constant 6 : i32
    %cst_118 = arith.constant dense<0.000000e+00> : vector<2x64xf32>
    %241 = tpu.matmul %240, %0, %cst_118 {dimension_numbers = #tpu.dot_dimension_numbers<[1], [0], [0], [1], [0, 0, 1, 1], [], []>} : vector<2x64xf32>, vector<64x64xf32>, vector<2x64xf32> -> vector<2x64xf32>
    %242 = arith.addf %241, %3 : vector<2x64xf32>
    %243 = math.tanh %242 : vector<2x64xf32>
    %cst_119 = arith.constant dense<0.000000e+00> : vector<2x64xf32>
    %244 = tpu.matmul %243, %6, %cst_119 {dimension_numbers = #tpu.dot_dimension_numbers<[1], [0], [0], [1], [0, 0, 1, 1], [], []>} : vector<2x64xf32>, vector<64x64xf32>, vector<2x64xf32> -> vector<2x64xf32>
    %245 = arith.addf %244, %11 : vector<2x64xf32>
    %246 = arith.addf %240, %245 : vector<2x64xf32>
    %c7_i32_120 = arith.constant 7 : i32
    %cst_121 = arith.constant dense<0.000000e+00> : vector<2x64xf32>
    %247 = tpu.matmul %246, %0, %cst_121 {dimension_numbers = #tpu.dot_dimension_numbers<[1], [0], [0], [1], [0, 0, 1, 1], [], []>} : vector<2x64xf32>, vector<64x64xf32>, vector<2x64xf32> -> vector<2x64xf32>
    %248 = arith.addf %247, %3 : vector<2x64xf32>
    %249 = math.tanh %248 : vector<2x64xf32>
    %cst_122 = arith.constant dense<0.000000e+00> : vector<2x64xf32>
    %250 = tpu.matmul %249, %6, %cst_122 {dimension_numbers = #tpu.dot_dimension_numbers<[1], [0], [0], [1], [0, 0, 1, 1], [], []>} : vector<2x64xf32>, vector<64x64xf32>, vector<2x64xf32> -> vector<2x64xf32>
    %251 = arith.addf %250, %11 : vector<2x64xf32>
    %252 = arith.addf %246, %251 : vector<2x64xf32>
    %c8_i32_123 = arith.constant 8 : i32
    %cst_124 = arith.constant dense<0.000000e+00> : vector<2x64xf32>
    %253 = tpu.matmul %252, %0, %cst_124 {dimension_numbers = #tpu.dot_dimension_numbers<[1], [0], [0], [1], [0, 0, 1, 1], [], []>} : vector<2x64xf32>, vector<64x64xf32>, vector<2x64xf32> -> vector<2x64xf32>
    %254 = arith.addf %253, %3 : vector<2x64xf32>
    %255 = math.tanh %254 : vector<2x64xf32>
    %cst_125 = arith.constant dense<0.000000e+00> : vector<2x64xf32>
    %256 = tpu.matmul %255, %6, %cst_125 {dimension_numbers = #tpu.dot_dimension_numbers<[1], [0], [0], [1], [0, 0, 1, 1], [], []>} : vector<2x64xf32>, vector<64x64xf32>, vector<2x64xf32> -> vector<2x64xf32>
    %257 = arith.addf %256, %11 : vector<2x64xf32>
    %258 = arith.addf %252, %257 : vector<2x64xf32>
    %c9_i32_126 = arith.constant 9 : i32
    %cst_127 = arith.constant dense<0.000000e+00> : vector<2x64xf32>
    %259 = tpu.matmul %258, %0, %cst_127 {dimension_numbers = #tpu.dot_dimension_numbers<[1], [0], [0], [1], [0, 0, 1, 1], [], []>} : vector<2x64xf32>, vector<64x64xf32>, vector<2x64xf32> -> vector<2x64xf32>
    %260 = arith.addf %259, %3 : vector<2x64xf32>
    %261 = math.tanh %260 : vector<2x64xf32>
    %cst_128 = arith.constant dense<0.000000e+00> : vector<2x64xf32>
    %262 = tpu.matmul %261, %6, %cst_128 {dimension_numbers = #tpu.dot_dimension_numbers<[1], [0], [0], [1], [0, 0, 1, 1], [], []>} : vector<2x64xf32>, vector<64x64xf32>, vector<2x64xf32> -> vector<2x64xf32>
    %263 = arith.addf %262, %11 : vector<2x64xf32>
    %264 = arith.addf %258, %263 : vector<2x64xf32>
    %c4 = arith.constant 4 : index
    %c0_129 = arith.constant 0 : index
    %c0_130 = arith.constant 0 : index
    %265 = vector.load %arg5[%c4, %c0_129, %c0_130] : memref<5x2x64xf32, #tpu.memory_space<vmem>>, vector<1x2x64xf32>
    %266 = vector.shape_cast %265 : vector<1x2x64xf32> to vector<2x64xf32>
    %267 = vector.shape_cast %264 : vector<2x64xf32> to vector<1x2x64xf32>
    tpu.vector_store %arg5[%c4, %c0_129, %c0_130], %267 {strides = array<i32>} : memref<5x2x64xf32, #tpu.memory_space<vmem>>, vector<1x2x64xf32>,
    return
  }
}

</mosaic_0001>

<llo_original>
// kernel: fwd.1
$region0: #{fwd.1}
  #allocation0 [shape = 'u32[]', space=smem, size = 0x4, offset = 0x4, fixed_abs, tag = 'smem constant byte address 0x4 - core index']
  #allocation1 [shape = 'u32[72,128]{1,0:T(1,128)}', space=vmem, size = 0x9000, scoped, tag = 'internal scratch']
  %s0 = inlined_call_operand.vmem [shape: f32[2,512], index: 0, kind: input, shape index: {}]
  %s1 = inlined_call_operand.vmem [shape: f32[64,64], index: 1, kind: input, shape index: {}]
  %s2 = inlined_call_operand.vmem [shape: f32[1,64], index: 2, kind: input, shape index: {}]
  %s3 = inlined_call_operand.hbm [shape: f32[64,64], index: 3, kind: input, shape index: {}]
  %s4 = inlined_call_operand.vmem [shape: f32[1,64], index: 4, kind: input, shape index: {}]
  %s5 = inlined_call_operand.vmem [shape: f32[5,2,64], index: 5, kind: output, shape index: {}]
  %s6 = sld [smem:[#allocation0]]
  $region34: #{fwd.1} parent=0
    _
  %s8 = ssub.s32 1, %s6
  %s9 = scalar_select 0, %s8, %s6
  $region1: #{fwd.1} parent=0
    #allocation2 [shape = 'u8[32768]{0}', space=vmem, size = 0x8000, scoped, tag = 'input window, operand 3, single buffered']
    #allocation3 [shape = 's32[1]{0}', space=sflag, size = 0x4, scoped, tag = 'scoped memory for fwd.1']
    %10 = vsyncpa [#allocation3], 0
    // Predicated region
    $region2: #{fwd.1} parent=1 // pred_check
      _
    $region3: #{fwd.1} parent=1 // pred_check_branch
      %12 = sbr.rel (0) target = $region5
    $region4: #{fwd.1} parent=1 // pred_region
      _
    $region5: #{fwd.1} parent=1 // pred_fallthru
      _
    // Predicated region
    $region6: #{fwd.1} parent=1 // pred_check
      _
    $region7: #{fwd.1} parent=1 // pred_check_branch
      %14 = sbr.rel (0) target = $region9
    $region8: #{fwd.1} parent=1 // pred_region
      _
    $region9: #{fwd.1} parent=1 // pred_fallthru
      _
    // Predicated region
    $region10: #{fwd.1} parent=1 // pred_check
      _
    $region11: #{fwd.1} parent=1 // pred_check_branch
      %16 = sbr.rel (0) target = $region13
    $region12: #{fwd.1} parent=1 // pred_region
      _
    $region13: #{fwd.1} parent=1 // pred_fallthru
      _
    // Predicated region
    $region14: #{fwd.1} parent=1 // pred_check
      _
    $region15: #{fwd.1} parent=1 // pred_check_branch
      %18 = sbr.rel (0) target = $region17
    $region16: #{fwd.1} parent=1 // pred_region
      %20 = vsyncadd [#allocation3], 0
      %s21 = sshll.u32 %s3, 4
      %s22 = int_to_ptr.hbm [resolvable:$true] %s21
      %s23 = sshll.u32 [#allocation2], 4
      %s24 = int_to_ptr.vmem [resolvable:$true] %s23
      %29 = dma.hbm_to_vmem [thread:$0]  %s22, 1024, %s24, [#allocation3], 128, 128, 8
    $region17: #{fwd.1} parent=1 // pred_fallthru
      _
    // Predicated region
    $region18: #{fwd.1} parent=1 // pred_check
      _
    $region19: #{fwd.1} parent=1 // pred_check_branch
      %31 = sbr.rel (0) target = $region21
    $region20: #{fwd.1} parent=1 // pred_region
      _
    $region21: #{fwd.1} parent=1 // pred_fallthru
      _
    // Predicated region
    $region22: #{fwd.1} parent=1 // pred_check
      _
    $region23: #{fwd.1} parent=1 // pred_check_branch
      %33 = sbr.rel (0) target = $region25
    $region24: #{fwd.1} parent=1 // pred_region
      %35 = dma.done [#allocation3], 1024
    $region25: #{fwd.1} parent=1 // pred_fallthru
      _
    %v36 = vld [vmem:[%s1] sm:$0xff]
    %v37 = vld [vmem:[%s1 + $0x8] sm:$0xff]
    %v38 = vld [vmem:[%s1 + $0x10] sm:$0xff]
    %v39 = vld [vmem:[%s1 + $0x18] sm:$0xff]
    %v40 = vld [vmem:[%s1 + $0x20] sm:$0xff]
    %v41 = vld [vmem:[%s1 + $0x28] sm:$0xff]
    %v42 = vld [vmem:[%s1 + $0x30] sm:$0xff]
    %v43 = vld [vmem:[%s1 + $0x38] sm:$0xff]
    %v44 = vld [vmem:[%s2] sm:$0x1]
    %v46 = vperm.slane %v44, 0
    %v48 = vld [vmem:[#allocation2] sm:$0xff]
    %v49 = vld [vmem:[#allocation2 + $0x8] sm:$0xff]
    %v50 = vld [vmem:[#allocation2 + $0x10] sm:$0xff]
    %v51 = vld [vmem:[#allocation2 + $0x18] sm:$0xff]
    %v52 = vld [vmem:[#allocation2 + $0x20] sm:$0xff]
    %v53 = vld [vmem:[#allocation2 + $0x28] sm:$0xff]
    %v54 = vld [vmem:[#allocation2 + $0x30] sm:$0xff]
    %v55 = vld [vmem:[#allocation2 + $0x38] sm:$0xff]
    %v56 = vmul.f32 %v48, 0.001
    %v57 = vmul.f32 %v49, 0.001
    %v58 = vmul.f32 %v50, 0.001
    %v59 = vmul.f32 %v51, 0.001
    %v60 = vmul.f32 %v52, 0.001
    %v61 = vmul.f32 %v53, 0.001
    %v62 = vmul.f32 %v54, 0.001
    %v63 = vmul.f32 %v55, 0.001
    %v64 = vld [vmem:[%s4] sm:$0x1]
    %v65 = vmul.f32 %v64, 0.001
    %v67 = vperm.slane %v65, 0
    %v69 = vld [vmem:[%s0] sm:$0x3]
    %vm70 = vcmask 517120
    %71 = vst.msk [vmem:[%s5] sm:$0x3] %vm70, %v69
    %vm72 = vcmask 523264
    %v74 = vsel %vm72, %v69, 0
    %76 = vmatpush.msra.mxu0 0.0
    %77 = vmatpush.msra.mxu0 0.0
    %78 = vmatpush.msra.mxu0 0.0
    %79 = vmatpush.msra.mxu0 0.0
    %80 = vmatpush.msra.mxu0 0.0
    %81 = vmatpush.msra.mxu0 0.0
    %82 = vmatpush.msra.mxu0 0.0
    %83 = vmatpush.msra.mxu0 0.0
    %84 = vmatpush.msra.mxu0 %v43
    %85 = vmatpush.msra.mxu0 %v42
    %86 = vmatpush.msra.mxu0 %v41
    %87 = vmatpush.msra.mxu0 %v40
    %88 = vmatpush.msra.mxu0 %v39
    %89 = vmatpush.msra.mxu0 %v38
    %90 = vmatpush.msra.mxu0 %v37
    %91 = vmatpush.msra.mxu0 %v36
    %92 = vmatmul.f32.gmra.mxu0 %v74
    %v93 = vpop.f32.mrf.mxu0
    %v94 = vadd.f32 %v46, %v93
    %95 = vdwg.mxu0
    %v96 = vtanh.pop %v94
    %v98 = vsel %vm72, %v96, 0
    %100 = vmatpush.msra.mxu0 0.0
    %101 = vmatpush.msra.mxu0 0.0
    %102 = vmatpush.msra.mxu0 0.0
    %103 = vmatpush.msra.mxu0 0.0
    %104 = vmatpush.msra.mxu0 0.0
    %105 = vmatpush.msra.mxu0 0.0
    %106 = vmatpush.msra.mxu0 0.0
    %107 = vmatpush.msra.mxu0 0.0
    %108 = vmatpush.msra.mxu0 %v63
    %109 = vmatpush.msra.mxu0 %v62
    %110 = vmatpush.msra.mxu0 %v61
    %111 = vmatpush.msra.mxu0 %v60
    %112 = vmatpush.msra.mxu0 %v59
    %113 = vmatpush.msra.mxu0 %v58
    %114 = vmatpush.msra.mxu0 %v57
    %115 = vmatpush.msra.mxu0 %v56
    %116 = vmatmul.f32.gmra.mxu0 %v98
    %v117 = vpop.f32.mrf.mxu0
    %v118 = vadd.f32 %v67, %v117
    %119 = vdwg.mxu0
    %v120 = vadd.f32 %v69, %v118
    %v122 = vsel %vm72, %v120, 0
    %124 = vmatpush.msra.mxu0 0.0
    %125 = vmatpush.msra.mxu0 0.0
    %126 = vmatpush.msra.mxu0 0.0
    %127 = vmatpush.msra.mxu0 0.0
    %128 = vmatpush.msra.mxu0 0.0
    %129 = vmatpush.msra.mxu0 0.0
    %130 = vmatpush.msra.mxu0 0.0
    %131 = vmatpush.msra.mxu0 0.0
    %132 = vmatpush.msra.mxu0 %v43
    %133 = vmatpush.msra.mxu0 %v42
    %134 = vmatpush.msra.mxu0 %v41
    %135 = vmatpush.msra.mxu0 %v40
    %136 = vmatpush.msra.mxu0 %v39
    %137 = vmatpush.msra.mxu0 %v38
    %138 = vmatpush.msra.mxu0 %v37
    %139 = vmatpush.msra.mxu0 %v36
    %140 = vmatmul.f32.gmra.mxu0 %v122
    %v141 = vpop.f32.mrf.mxu0
    %v142 = vadd.f32 %v46, %v141
    %143 = vdwg.mxu0
    %v144 = vtanh.pop %v142
    %v146 = vsel %vm72, %v144, 0
    %148 = vmatpush.msra.mxu0 0.0
    %149 = vmatpush.msra.mxu0 0.0
    %150 = vmatpush.msra.mxu0 0.0
    %151 = vmatpush.msra.mxu0 0.0
    %152 = vmatpush.msra.mxu0 0.0
    %153 = vmatpush.msra.mxu0 0.0
    %154 = vmatpush.msra.mxu0 0.0
    %155 = vmatpush.msra.mxu0 0.0
    %156 = vmatpush.msra.mxu0 %v63
    %157 = vmatpush.msra.mxu0 %v62
    %158 = vmatpush.msra.mxu0 %v61
    %159 = vmatpush.msra.mxu0 %v60
    %160 = vmatpush.msra.mxu0 %v59
    %161 = vmatpush.msra.mxu0 %v58
    %162 = vmatpush.msra.mxu0 %v57
    %163 = vmatpush.msra.mxu0 %v56
    %164 = vmatmul.f32.gmra.mxu0 %v146
    %v165 = vpop.f32.mrf.mxu0
    %v166 = vadd.f32 %v67, %v165
    %167 = vdwg.mxu0
    %v168 = vadd.f32 %v120, %v166
    %v170 = vsel %vm72, %v168, 0
    %172 = vmatpush.msra.mxu0 0.0
    %173 = vmatpush.msra.mxu0 0.0
    %174 = vmatpush.msra.mxu0 0.0
    %175 = vmatpush.msra.mxu0 0.0
    %176 = vmatpush.msra.mxu0 0.0
    %177 = vmatpush.msra.mxu0 0.0
    %178 = vmatpush.msra.mxu0 0.0
    %179 = vmatpush.msra.mxu0 0.0
    %180 = vmatpush.msra.mxu0 %v43
    %181 = vmatpush.msra.mxu0 %v42
    %182 = vmatpush.msra.mxu0 %v41
    %183 = vmatpush.msra.mxu0 %v40
    %184 = vmatpush.msra.mxu0 %v39
    %185 = vmatpush.msra.mxu0 %v38
    %186 = vmatpush.msra.mxu0 %v37
    %187 = vmatpush.msra.mxu0 %v36
    %188 = vmatmul.f32.gmra.mxu0 %v170
    %v189 = vpop.f32.mrf.mxu0
    %v190 = vadd.f32 %v46, %v189
    %191 = vdwg.mxu0
    %v192 = vtanh.pop %v190
    %v194 = vsel %vm72, %v192, 0
    %196 = vmatpush.msra.mxu0 0.0
    %197 = vmatpush.msra.mxu0 0.0
    %198 = vmatpush.msra.mxu0 0.0
    %199 = vmatpush.msra.mxu0 0.0
    %200 = vmatpush.msra.mxu0 0.0
    %201 = vmatpush.msra.mxu0 0.0
    %202 = vmatpush.msra.mxu0 0.0
    %203 = vmatpush.msra.mxu0 0.0
    %204 = vmatpush.msra.mxu0 %v63
    %205 = vmatpush.msra.mxu0 %v62
    %206 = vmatpush.msra.mxu0 %v61
    %207 = vmatpush.msra.mxu0 %v60
    %208 = vmatpush.msra.mxu0 %v59
    %209 = vmatpush.msra.mxu0 %v58
    %210 = vmatpush.msra.mxu0 %v57
    %211 = vmatpush.msra.mxu0 %v56
    %212 = vmatmul.f32.gmra.mxu0 %v194
    %v213 = vpop.f32.mrf.mxu0
    %v214 = vadd.f32 %v67, %v213
    %215 = vdwg.mxu0
    %v216 = vadd.f32 %v168, %v214
    %v218 = vsel %vm72, %v216, 0
    %220 = vmatpush.msra.mxu0 0.0
    %221 = vmatpush.msra.mxu0 0.0
    %222 = vmatpush.msra.mxu0 0.0
    %223 = vmatpush.msra.mxu0 0.0
    %224 = vmatpush.msra.mxu0 0.0
    %225 = vmatpush.msra.mxu0 0.0
    %226 = vmatpush.msra.mxu0 0.0
    %227 = vmatpush.msra.mxu0 0.0
    %228 = vmatpush.msra.mxu0 %v43
    %229 = vmatpush.msra.mxu0 %v42
    %230 = vmatpush.msra.mxu0 %v41
    %231 = vmatpush.msra.mxu0 %v40
    %232 = vmatpush.msra.mxu0 %v39
    %233 = vmatpush.msra.mxu0 %v38
    %234 = vmatpush.msra.mxu0 %v37
    %235 = vmatpush.msra.mxu0 %v36
    %236 = vmatmul.f32.gmra.mxu0 %v218
    %v237 = vpop.f32.mrf.mxu0
    %v238 = vadd.f32 %v46, %v237
    %239 = vdwg.mxu0
    %v240 = vtanh.pop %v238
    %v242 = vsel %vm72, %v240, 0
    %244 = vmatpush.msra.mxu0 0.0
    %245 = vmatpush.msra.mxu0 0.0
    %246 = vmatpush.msra.mxu0 0.0
    %247 = vmatpush.msra.mxu0 0.0
    %248 = vmatpush.msra.mxu0 0.0
    %249 = vmatpush.msra.mxu0 0.0
    %250 = vmatpush.msra.mxu0 0.0
    %251 = vmatpush.msra.mxu0 0.0
    %252 = vmatpush.msra.mxu0 %v63
    %253 = vmatpush.msra.mxu0 %v62
    %254 = vmatpush.msra.mxu0 %v61
    %255 = vmatpush.msra.mxu0 %v60
    %256 = vmatpush.msra.mxu0 %v59
    %257 = vmatpush.msra.mxu0 %v58
    %258 = vmatpush.msra.mxu0 %v57
    %259 = vmatpush.msra.mxu0 %v56
    %260 = vmatmul.f32.gmra.mxu0 %v242
    %v261 = vpop.f32.mrf.mxu0
    %v262 = vadd.f32 %v67, %v261
    %263 = vdwg.mxu0
    %v264 = vadd.f32 %v216, %v262
    %v266 = vsel %vm72, %v264, 0
    %268 = vmatpush.msra.mxu0 0.0
    %269 = vmatpush.msra.mxu0 0.0
    %270 = vmatpush.msra.mxu0 0.0
    %271 = vmatpush.msra.mxu0 0.0
    %272 = vmatpush.msra.mxu0 0.0
    %273 = vmatpush.msra.mxu0 0.0
    %274 = vmatpush.msra.mxu0 0.0
    %275 = vmatpush.msra.mxu0 0.0
    %276 = vmatpush.msra.mxu0 %v43
    %277 = vmatpush.msra.mxu0 %v42
    %278 = vmatpush.msra.mxu0 %v41
    %279 = vmatpush.msra.mxu0 %v40
    %280 = vmatpush.msra.mxu0 %v39
    %281 = vmatpush.msra.mxu0 %v38
    %282 = vmatpush.msra.mxu0 %v37
    %283 = vmatpush.msra.mxu0 %v36
    %284 = vmatmul.f32.gmra.mxu0 %v266
    %v285 = vpop.f32.mrf.mxu0
    %v286 = vadd.f32 %v46, %v285
    %287 = vdwg.mxu0
    %v288 = vtanh.pop %v286
    %v290 = vsel %vm72, %v288, 0
    %292 = vmatpush.msra.mxu0 0.0
    %293 = vmatpush.msra.mxu0 0.0
    %294 = vmatpush.msra.mxu0 0.0
    %295 = vmatpush.msra.mxu0 0.0
    %296 = vmatpush.msra.mxu0 0.0
    %297 = vmatpush.msra.mxu0 0.0
    %298 = vmatpush.msra.mxu0 0.0
    %299 = vmatpush.msra.mxu0 0.0
    %300 = vmatpush.msra.mxu0 %v63
    %301 = vmatpush.msra.mxu0 %v62
    %302 = vmatpush.msra.mxu0 %v61
    %303 = vmatpush.msra.mxu0 %v60
    %304 = vmatpush.msra.mxu0 %v59
    %305 = vmatpush.msra.mxu0 %v58
    %306 = vmatpush.msra.mxu0 %v57
    %307 = vmatpush.msra.mxu0 %v56
    %308 = vmatmul.f32.gmra.mxu0 %v290
    %v309 = vpop.f32.mrf.mxu0
    %v310 = vadd.f32 %v67, %v309
    %311 = vdwg.mxu0
    %v312 = vadd.f32 %v264, %v310
    %v314 = vsel %vm72, %v312, 0
    %316 = vmatpush.msra.mxu0 0.0
    %317 = vmatpush.msra.mxu0 0.0
    %318 = vmatpush.msra.mxu0 0.0
    %319 = vmatpush.msra.mxu0 0.0
    %320 = vmatpush.msra.mxu0 0.0
    %321 = vmatpush.msra.mxu0 0.0
    %322 = vmatpush.msra.mxu0 0.0
    %323 = vmatpush.msra.mxu0 0.0
    %324 = vmatpush.msra.mxu0 %v43
    %325 = vmatpush.msra.mxu0 %v42
    %326 = vmatpush.msra.mxu0 %v41
    %327 = vmatpush.msra.mxu0 %v40
    %328 = vmatpush.msra.mxu0 %v39
    %329 = vmatpush.msra.mxu0 %v38
    %330 = vmatpush.msra.mxu0 %v37
    %331 = vmatpush.msra.mxu0 %v36
    %332 = vmatmul.f32.gmra.mxu0 %v314
    %v333 = vpop.f32.mrf.mxu0
    %v334 = vadd.f32 %v46, %v333
    %335 = vdwg.mxu0
    %v336 = vtanh.pop %v334
    %v338 = vsel %vm72, %v336, 0
    %340 = vmatpush.msra.mxu0 0.0
    %341 = vmatpush.msra.mxu0 0.0
    %342 = vmatpush.msra.mxu0 0.0
    %343 = vmatpush.msra.mxu0 0.0
    %344 = vmatpush.msra.mxu0 0.0
    %345 = vmatpush.msra.mxu0 0.0
    %346 = vmatpush.msra.mxu0 0.0
    %347 = vmatpush.msra.mxu0 0.0
    %348 = vmatpush.msra.mxu0 %v63
    %349 = vmatpush.msra.mxu0 %v62
    %350 = vmatpush.msra.mxu0 %v61
    %351 = vmatpush.msra.mxu0 %v60
    %352 = vmatpush.msra.mxu0 %v59
    %353 = vmatpush.msra.mxu0 %v58
    %354 = vmatpush.msra.mxu0 %v57
    %355 = vmatpush.msra.mxu0 %v56
    %356 = vmatmul.f32.gmra.mxu0 %v338
    %v357 = vpop.f32.mrf.mxu0
    %v358 = vadd.f32 %v67, %v357
    %359 = vdwg.mxu0
    %v360 = vadd.f32 %v312, %v358
    %v362 = vsel %vm72, %v360, 0
    %364 = vmatpush.msra.mxu0 0.0
    %365 = vmatpush.msra.mxu0 0.0
    %366 = vmatpush.msra.mxu0 0.0
    %367 = vmatpush.msra.mxu0 0.0
    %368 = vmatpush.msra.mxu0 0.0
    %369 = vmatpush.msra.mxu0 0.0
    %370 = vmatpush.msra.mxu0 0.0
    %371 = vmatpush.msra.mxu0 0.0
    %372 = vmatpush.msra.mxu0 %v43
    %373 = vmatpush.msra.mxu0 %v42
    %374 = vmatpush.msra.mxu0 %v41
    %375 = vmatpush.msra.mxu0 %v40
    %376 = vmatpush.msra.mxu0 %v39
    %377 = vmatpush.msra.mxu0 %v38
    %378 = vmatpush.msra.mxu0 %v37
    %379 = vmatpush.msra.mxu0 %v36
    %380 = vmatmul.f32.gmra.mxu0 %v362
    %v381 = vpop.f32.mrf.mxu0
    %v382 = vadd.f32 %v46, %v381
    %383 = vdwg.mxu0
    %v384 = vtanh.pop %v382
    %v386 = vsel %vm72, %v384, 0
    %388 = vmatpush.msra.mxu0 0.0
    %389 = vmatpush.msra.mxu0 0.0
    %390 = vmatpush.msra.mxu0 0.0
    %391 = vmatpush.msra.mxu0 0.0
    %392 = vmatpush.msra.mxu0 0.0
    %393 = vmatpush.msra.mxu0 0.0
    %394 = vmatpush.msra.mxu0 0.0
    %395 = vmatpush.msra.mxu0 0.0
    %396 = vmatpush.msra.mxu0 %v63
    %397 = vmatpush.msra.mxu0 %v62
    %398 = vmatpush.msra.mxu0 %v61
    %399 = vmatpush.msra.mxu0 %v60
    %400 = vmatpush.msra.mxu0 %v59
    %401 = vmatpush.msra.mxu0 %v58
    %402 = vmatpush.msra.mxu0 %v57
    %403 = vmatpush.msra.mxu0 %v56
    %404 = vmatmul.f32.gmra.mxu0 %v386
    %v405 = vpop.f32.mrf.mxu0
    %v406 = vadd.f32 %v67, %v405
    %407 = vdwg.mxu0
    %v408 = vadd.f32 %v360, %v406
    %v410 = vsel %vm72, %v408, 0
    %412 = vmatpush.msra.mxu0 0.0
    %413 = vmatpush.msra.mxu0 0.0
    %414 = vmatpush.msra.mxu0 0.0
    %415 = vmatpush.msra.mxu0 0.0
    %416 = vmatpush.msra.mxu0 0.0
    %417 = vmatpush.msra.mxu0 0.0
    %418 = vmatpush.msra.mxu0 0.0
    %419 = vmatpush.msra.mxu0 0.0
    %420 = vmatpush.msra.mxu0 %v43
    %421 = vmatpush.msra.mxu0 %v42
    %422 = vmatpush.msra.mxu0 %v41
    %423 = vmatpush.msra.mxu0 %v40
    %424 = vmatpush.msra.mxu0 %v39
    %425 = vmatpush.msra.mxu0 %v38
    %426 = vmatpush.msra.mxu0 %v37
    %427 = vmatpush.msra.mxu0 %v36
    %428 = vmatmul.f32.gmra.mxu0 %v410
    %v429 = vpop.f32.mrf.mxu0
    %v430 = vadd.f32 %v46, %v429
    %431 = vdwg.mxu0
    %v432 = vtanh.pop %v430
    %v434 = vsel %vm72, %v432, 0
    %436 = vmatpush.msra.mxu0 0.0
    %437 = vmatpush.msra.mxu0 0.0
    %438 = vmatpush.msra.mxu0 0.0
    %439 = vmatpush.msra.mxu0 0.0
    %440 = vmatpush.msra.mxu0 0.0
    %441 = vmatpush.msra.mxu0 0.0
    %442 = vmatpush.msra.mxu0 0.0
    %443 = vmatpush.msra.mxu0 0.0
    %444 = vmatpush.msra.mxu0 %v63
    %445 = vmatpush.msra.mxu0 %v62
    %446 = vmatpush.msra.mxu0 %v61
    %447 = vmatpush.msra.mxu0 %v60
    %448 = vmatpush.msra.mxu0 %v59
    %449 = vmatpush.msra.mxu0 %v58
    %450 = vmatpush.msra.mxu0 %v57
    %451 = vmatpush.msra.mxu0 %v56
    %452 = vmatmul.f32.gmra.mxu0 %v434
    %v453 = vpop.f32.mrf.mxu0
    %v454 = vadd.f32 %v67, %v453
    %455 = vdwg.mxu0
    %v456 = vadd.f32 %v408, %v454
    %v458 = vsel %vm72, %v456, 0
    %460 = vmatpush.msra.mxu0 0.0
    %461 = vmatpush.msra.mxu0 0.0
    %462 = vmatpush.msra.mxu0 0.0
    %463 = vmatpush.msra.mxu0 0.0
    %464 = vmatpush.msra.mxu0 0.0
    %465 = vmatpush.msra.mxu0 0.0
    %466 = vmatpush.msra.mxu0 0.0
    %467 = vmatpush.msra.mxu0 0.0
    %468 = vmatpush.msra.mxu0 %v43
    %469 = vmatpush.msra.mxu0 %v42
    %470 = vmatpush.msra.mxu0 %v41
    %471 = vmatpush.msra.mxu0 %v40
    %472 = vmatpush.msra.mxu0 %v39
    %473 = vmatpush.msra.mxu0 %v38
    %474 = vmatpush.msra.mxu0 %v37
    %475 = vmatpush.msra.mxu0 %v36
    %476 = vmatmul.f32.gmra.mxu0 %v458
    %v477 = vpop.f32.mrf.mxu0
    %v478 = vadd.f32 %v46, %v477
    %479 = vdwg.mxu0
    %v480 = vtanh.pop %v478
    %v482 = vsel %vm72, %v480, 0
    %484 = vmatpush.msra.mxu0 0.0
    %485 = vmatpush.msra.mxu0 0.0
    %486 = vmatpush.msra.mxu0 0.0
    %487 = vmatpush.msra.mxu0 0.0
    %488 = vmatpush.msra.mxu0 0.0
    %489 = vmatpush.msra.mxu0 0.0
    %490 = vmatpush.msra.mxu0 0.0
    %491 = vmatpush.msra.mxu0 0.0
    %492 = vmatpush.msra.mxu0 %v63
    %493 = vmatpush.msra.mxu0 %v62
    %494 = vmatpush.msra.mxu0 %v61
    %495 = vmatpush.msra.mxu0 %v60
    %496 = vmatpush.msra.mxu0 %v59
    %497 = vmatpush.msra.mxu0 %v58
    %498 = vmatpush.msra.mxu0 %v57
    %499 = vmatpush.msra.mxu0 %v56
    %500 = vmatmul.f32.gmra.mxu0 %v482
    %v501 = vpop.f32.mrf.mxu0
    %v502 = vadd.f32 %v67, %v501
    %503 = vdwg.mxu0
    %v504 = vadd.f32 %v456, %v502
    %v506 = vsel %vm72, %v504, 0
    %508 = vmatpush.msra.mxu0 0.0
    %509 = vmatpush.msra.mxu0 0.0
    %510 = vmatpush.msra.mxu0 0.0
    %511 = vmatpush.msra.mxu0 0.0
    %512 = vmatpush.msra.mxu0 0.0
    %513 = vmatpush.msra.mxu0 0.0
    %514 = vmatpush.msra.mxu0 0.0
    %515 = vmatpush.msra.mxu0 0.0
    %516 = vmatpush.msra.mxu0 %v43
    %517 = vmatpush.msra.mxu0 %v42
    %518 = vmatpush.msra.mxu0 %v41
    %519 = vmatpush.msra.mxu0 %v40
    %520 = vmatpush.msra.mxu0 %v39
    %521 = vmatpush.msra.mxu0 %v38
    %522 = vmatpush.msra.mxu0 %v37
    %523 = vmatpush.msra.mxu0 %v36
    %524 = vmatmul.f32.gmra.mxu0 %v506
    %v525 = vpop.f32.mrf.mxu0
    %v526 = vadd.f32 %v46, %v525
    %527 = vdwg.mxu0
    %v528 = vtanh.pop %v526
    %v530 = vsel %vm72, %v528, 0
    %532 = vmatpush.msra.mxu0 0.0
    %533 = vmatpush.msra.mxu0 0.0
    %534 = vmatpush.msra.mxu0 0.0
    %535 = vmatpush.msra.mxu0 0.0
    %536 = vmatpush.msra.mxu0 0.0
    %537 = vmatpush.msra.mxu0 0.0
    %538 = vmatpush.msra.mxu0 0.0
    %539 = vmatpush.msra.mxu0 0.0
    %540 = vmatpush.msra.mxu0 %v63
    %541 = vmatpush.msra.mxu0 %v62
    %542 = vmatpush.msra.mxu0 %v61
    %543 = vmatpush.msra.mxu0 %v60
    %544 = vmatpush.msra.mxu0 %v59
    %545 = vmatpush.msra.mxu0 %v58
    %546 = vmatpush.msra.mxu0 %v57
    %547 = vmatpush.msra.mxu0 %v56
    %548 = vmatmul.f32.gmra.mxu0 %v530
    %v549 = vpop.f32.mrf.mxu0
    %v550 = vadd.f32 %v67, %v549
    %551 = vdwg.mxu0
    %v552 = vadd.f32 %v504, %v550
    %s553 = scalar_lea.vmem %s5, 2
    %554 = vst.msk [vmem:[%s553] sm:$0x3] %vm70, %v552
    %v556 = vsel %vm72, %v552, 0
    %558 = vmatpush.msra.mxu0 0.0
    %559 = vmatpush.msra.mxu0 0.0
    %560 = vmatpush.msra.mxu0 0.0
    %561 = vmatpush.msra.mxu0 0.0
    %562 = vmatpush.msra.mxu0 0.0
    %563 = vmatpush.msra.mxu0 0.0
    %564 = vmatpush.msra.mxu0 0.0
    %565 = vmatpush.msra.mxu0 0.0
    %566 = vmatpush.msra.mxu0 %v43
    %567 = vmatpush.msra.mxu0 %v42
    %568 = vmatpush.msra.mxu0 %v41
    %569 = vmatpush.msra.mxu0 %v40
    %570 = vmatpush.msra.mxu0 %v39
    %571 = vmatpush.msra.mxu0 %v38
    %572 = vmatpush.msra.mxu0 %v37
    %573 = vmatpush.msra.mxu0 %v36
    %574 = vmatmul.f32.gmra.mxu0 %v556
    %v575 = vpop.f32.mrf.mxu0
    %v576 = vadd.f32 %v46, %v575
    %577 = vdwg.mxu0
    %v578 = vtanh.pop %v576
    %v580 = vsel %vm72, %v578, 0
    %582 = vmatpush.msra.mxu0 0.0
    %583 = vmatpush.msra.mxu0 0.0
    %584 = vmatpush.msra.mxu0 0.0
    %585 = vmatpush.msra.mxu0 0.0
    %586 = vmatpush.msra.mxu0 0.0
    %587 = vmatpush.msra.mxu0 0.0
    %588 = vmatpush.msra.mxu0 0.0
    %589 = vmatpush.msra.mxu0 0.0
    %590 = vmatpush.msra.mxu0 %v63
    %591 = vmatpush.msra.mxu0 %v62
    %592 = vmatpush.msra.mxu0 %v61
    %593 = vmatpush.msra.mxu0 %v60
    %594 = vmatpush.msra.mxu0 %v59
    %595 = vmatpush.msra.mxu0 %v58
    %596 = vmatpush.msra.mxu0 %v57
    %597 = vmatpush.msra.mxu0 %v56
    %598 = vmatmul.f32.gmra.mxu0 %v580
    %v599 = vpop.f32.mrf.mxu0
    %v600 = vadd.f32 %v67, %v599
    %601 = vdwg.mxu0
    %v602 = vadd.f32 %v552, %v600
    %v604 = vsel %vm72, %v602, 0
    %606 = vmatpush.msra.mxu0 0.0
    %607 = vmatpush.msra.mxu0 0.0
    %608 = vmatpush.msra.mxu0 0.0
    %609 = vmatpush.msra.mxu0 0.0
    %610 = vmatpush.msra.mxu0 0.0
    %611 = vmatpush.msra.mxu0 0.0
    %612 = vmatpush.msra.mxu0 0.0
    %613 = vmatpush.msra.mxu0 0.0
    %614 = vmatpush.msra.mxu0 %v43
    %615 = vmatpush.msra.mxu0 %v42
    %616 = vmatpush.msra.mxu0 %v41
    %617 = vmatpush.msra.mxu0 %v40
    %618 = vmatpush.msra.mxu0 %v39
    %619 = vmatpush.msra.mxu0 %v38
    %620 = vmatpush.msra.mxu0 %v37
    %621 = vmatpush.msra.mxu0 %v36
    %622 = vmatmul.f32.gmra.mxu0 %v604
    %v623 = vpop.f32.mrf.mxu0
    %v624 = vadd.f32 %v46, %v623
    %625 = vdwg.mxu0
    %v626 = vtanh.pop %v624
    %v628 = vsel %vm72, %v626, 0
    %630 = vmatpush.msra.mxu0 0.0
    %631 = vmatpush.msra.mxu0 0.0
    %632 = vmatpush.msra.mxu0 0.0
    %633 = vmatpush.msra.mxu0 0.0
    %634 = vmatpush.msra.mxu0 0.0
    %635 = vmatpush.msra.mxu0 0.0
    %636 = vmatpush.msra.mxu0 0.0
    %637 = vmatpush.msra.mxu0 0.0
    %638 = vmatpush.msra.mxu0 %v63
    %639 = vmatpush.msra.mxu0 %v62
    %640 = vmatpush.msra.mxu0 %v61
    %641 = vmatpush.msra.mxu0 %v60
    %642 = vmatpush.msra.mxu0 %v59
    %643 = vmatpush.msra.mxu0 %v58
    %644 = vmatpush.msra.mxu0 %v57
    %645 = vmatpush.msra.mxu0 %v56
    %646 = vmatmul.f32.gmra.mxu0 %v628
    %v647 = vpop.f32.mrf.mxu0
    %v648 = vadd.f32 %v67, %v647
    %649 = vdwg.mxu0
    %v650 = vadd.f32 %v602, %v648
    %v652 = vsel %vm72, %v650, 0
    %654 = vmatpush.msra.mxu0 0.0
    %655 = vmatpush.msra.mxu0 0.0
    %656 = vmatpush.msra.mxu0 0.0
    %657 = vmatpush.msra.mxu0 0.0
    %658 = vmatpush.msra.mxu0 0.0
    %659 = vmatpush.msra.mxu0 0.0
    %660 = vmatpush.msra.mxu0 0.0
    %661 = vmatpush.msra.mxu0 0.0
    %662 = vmatpush.msra.mxu0 %v43
    %663 = vmatpush.msra.mxu0 %v42
    %664 = vmatpush.msra.mxu0 %v41
    %665 = vmatpush.msra.mxu0 %v40
    %666 = vmatpush.msra.mxu0 %v39
    %667 = vmatpush.msra.mxu0 %v38
    %668 = vmatpush.msra.mxu0 %v37
    %669 = vmatpush.msra.mxu0 %v36
    %670 = vmatmul.f32.gmra.mxu0 %v652
    %v671 = vpop.f32.mrf.mxu0
    %v672 = vadd.f32 %v46, %v671
    %673 = vdwg.mxu0
    %v674 = vtanh.pop %v672
    %v676 = vsel %vm72, %v674, 0
    %678 = vmatpush.msra.mxu0 0.0
    %679 = vmatpush.msra.mxu0 0.0
    %680 = vmatpush.msra.mxu0 0.0
    %681 = vmatpush.msra.mxu0 0.0
    %682 = vmatpush.msra.mxu0 0.0
    %683 = vmatpush.msra.mxu0 0.0
    %684 = vmatpush.msra.mxu0 0.0
    %685 = vmatpush.msra.mxu0 0.0
    %686 = vmatpush.msra.mxu0 %v63
    %687 = vmatpush.msra.mxu0 %v62
    %688 = vmatpush.msra.mxu0 %v61
    %689 = vmatpush.msra.mxu0 %v60
    %690 = vmatpush.msra.mxu0 %v59
    %691 = vmatpush.msra.mxu0 %v58
    %692 = vmatpush.msra.mxu0 %v57
    %693 = vmatpush.msra.mxu0 %v56
    %694 = vmatmul.f32.gmra.mxu0 %v676
    %v695 = vpop.f32.mrf.mxu0
    %v696 = vadd.f32 %v67, %v695
    %697 = vdwg.mxu0
    %v698 = vadd.f32 %v650, %v696
    %v700 = vsel %vm72, %v698, 0
    %702 = vmatpush.msra.mxu0 0.0
    %703 = vmatpush.msra.mxu0 0.0
    %704 = vmatpush.msra.mxu0 0.0
    %705 = vmatpush.msra.mxu0 0.0
    %706 = vmatpush.msra.mxu0 0.0
    %707 = vmatpush.msra.mxu0 0.0
    %708 = vmatpush.msra.mxu0 0.0
    %709 = vmatpush.msra.mxu0 0.0
    %710 = vmatpush.msra.mxu0 %v43
    %711 = vmatpush.msra.mxu0 %v42
    %712 = vmatpush.msra.mxu0 %v41
    %713 = vmatpush.msra.mxu0 %v40
    %714 = vmatpush.msra.mxu0 %v39
    %715 = vmatpush.msra.mxu0 %v38
    %716 = vmatpush.msra.mxu0 %v37
    %717 = vmatpush.msra.mxu0 %v36
    %718 = vmatmul.f32.gmra.mxu0 %v700
    %v719 = vpop.f32.mrf.mxu0
    %v720 = vadd.f32 %v46, %v719
    %721 = vdwg.mxu0
    %v722 = vtanh.pop %v720
    %v724 = vsel %vm72, %v722, 0
    %726 = vmatpush.msra.mxu0 0.0
    %727 = vmatpush.msra.mxu0 0.0
    %728 = vmatpush.msra.mxu0 0.0
    %729 = vmatpush.msra.mxu0 0.0
    %730 = vmatpush.msra.mxu0 0.0
    %731 = vmatpush.msra.mxu0 0.0
    %732 = vmatpush.msra.mxu0 0.0
    %733 = vmatpush.msra.mxu0 0.0
    %734 = vmatpush.msra.mxu0 %v63
    %735 = vmatpush.msra.mxu0 %v62
    %736 = vmatpush.msra.mxu0 %v61
    %737 = vmatpush.msra.mxu0 %v60
    %738 = vmatpush.msra.mxu0 %v59
    %739 = vmatpush.msra.mxu0 %v58
    %740 = vmatpush.msra.mxu0 %v57
    %741 = vmatpush.msra.mxu0 %v56
    %742 = vmatmul.f32.gmra.mxu0 %v724
    %v743 = vpop.f32.mrf.mxu0
    %v744 = vadd.f32 %v67, %v743
    %745 = vdwg.mxu0
    %v746 = vadd.f32 %v698, %v744
    %v748 = vsel %vm72, %v746, 0
    %750 = vmatpush.msra.mxu0 0.0
    %751 = vmatpush.msra.mxu0 0.0
    %752 = vmatpush.msra.mxu0 0.0
    %753 = vmatpush.msra.mxu0 0.0
    %754 = vmatpush.msra.mxu0 0.0
    %755 = vmatpush.msra.mxu0 0.0
    %756 = vmatpush.msra.mxu0 0.0
    %757 = vmatpush.msra.mxu0 0.0
    %758 = vmatpush.msra.mxu0 %v43
    %759 = vmatpush.msra.mxu0 %v42
    %760 = vmatpush.msra.mxu0 %v41
    %761 = vmatpush.msra.mxu0 %v40
    %762 = vmatpush.msra.mxu0 %v39
    %763 = vmatpush.msra.mxu0 %v38
    %764 = vmatpush.msra.mxu0 %v37
    %765 = vmatpush.msra.mxu0 %v36
    %766 = vmatmul.f32.gmra.mxu0 %v748
    %v767 = vpop.f32.mrf.mxu0
    %v768 = vadd.f32 %v46, %v767
    %769 = vdwg.mxu0
    %v770 = vtanh.pop %v768
    %v772 = vsel %vm72, %v770, 0
    %774 = vmatpush.msra.mxu0 0.0
    %775 = vmatpush.msra.mxu0 0.0
    %776 = vmatpush.msra.mxu0 0.0
    %777 = vmatpush.msra.mxu0 0.0
    %778 = vmatpush.msra.mxu0 0.0
    %779 = vmatpush.msra.mxu0 0.0
    %780 = vmatpush.msra.mxu0 0.0
    %781 = vmatpush.msra.mxu0 0.0
    %782 = vmatpush.msra.mxu0 %v63
    %783 = vmatpush.msra.mxu0 %v62
    %784 = vmatpush.msra.mxu0 %v61
    %785 = vmatpush.msra.mxu0 %v60
    %786 = vmatpush.msra.mxu0 %v59
    %787 = vmatpush.msra.mxu0 %v58
    %788 = vmatpush.msra.mxu0 %v57
    %789 = vmatpush.msra.mxu0 %v56
    %790 = vmatmul.f32.gmra.mxu0 %v772
    %v791 = vpop.f32.mrf.mxu0
    %v792 = vadd.f32 %v67, %v791
    %793 = vdwg.mxu0
    %v794 = vadd.f32 %v746, %v792
    %v796 = vsel %vm72, %v794, 0
    %798 = vmatpush.msra.mxu0 0.0
    %799 = vmatpush.msra.mxu0 0.0
    %800 = vmatpush.msra.mxu0 0.0
    %801 = vmatpush.msra.mxu0 0.0
    %802 = vmatpush.msra.mxu0 0.0
    %803 = vmatpush.msra.mxu0 0.0
    %804 = vmatpush.msra.mxu0 0.0
    %805 = vmatpush.msra.mxu0 0.0
    %806 = vmatpush.msra.mxu0 %v43
    %807 = vmatpush.msra.mxu0 %v42
    %808 = vmatpush.msra.mxu0 %v41
    %809 = vmatpush.msra.mxu0 %v40
    %810 = vmatpush.msra.mxu0 %v39
    %811 = vmatpush.msra.mxu0 %v38
    %812 = vmatpush.msra.mxu0 %v37
    %813 = vmatpush.msra.mxu0 %v36
    %814 = vmatmul.f32.gmra.mxu0 %v796
    %v815 = vpop.f32.mrf.mxu0
    %v816 = vadd.f32 %v46, %v815
    %817 = vdwg.mxu0
    %v818 = vtanh.pop %v816
    %v820 = vsel %vm72, %v818, 0
    %822 = vmatpush.msra.mxu0 0.0
    %823 = vmatpush.msra.mxu0 0.0
    %824 = vmatpush.msra.mxu0 0.0
    %825 = vmatpush.msra.mxu0 0.0
    %826 = vmatpush.msra.mxu0 0.0
    %827 = vmatpush.msra.mxu0 0.0
    %828 = vmatpush.msra.mxu0 0.0
    %829 = vmatpush.msra.mxu0 0.0
    %830 = vmatpush.msra.mxu0 %v63
    %831 = vmatpush.msra.mxu0 %v62
    %832 = vmatpush.msra.mxu0 %v61
    %833 = vmatpush.msra.mxu0 %v60
    %834 = vmatpush.msra.mxu0 %v59
    %835 = vmatpush.msra.mxu0 %v58
    %836 = vmatpush.msra.mxu0 %v57
    %837 = vmatpush.msra.mxu0 %v56
    %838 = vmatmul.f32.gmra.mxu0 %v820
    %v839 = vpop.f32.mrf.mxu0
    %v840 = vadd.f32 %v67, %v839
    %841 = vdwg.mxu0
    %v842 = vadd.f32 %v794, %v840
    %v844 = vsel %vm72, %v842, 0
    %846 = vmatpush.msra.mxu0 0.0
    %847 = vmatpush.msra.mxu0 0.0
    %848 = vmatpush.msra.mxu0 0.0
    %849 = vmatpush.msra.mxu0 0.0
    %850 = vmatpush.msra.mxu0 0.0
    %851 = vmatpush.msra.mxu0 0.0
    %852 = vmatpush.msra.mxu0 0.0
    %853 = vmatpush.msra.mxu0 0.0
    %854 = vmatpush.msra.mxu0 %v43
    %855 = vmatpush.msra.mxu0 %v42
    %856 = vmatpush.msra.mxu0 %v41
    %857 = vmatpush.msra.mxu0 %v40
    %858 = vmatpush.msra.mxu0 %v39
    %859 = vmatpush.msra.mxu0 %v38
    %860 = vmatpush.msra.mxu0 %v37
    %861 = vmatpush.msra.mxu0 %v36
    %862 = vmatmul.f32.gmra.mxu0 %v844
    %v863 = vpop.f32.mrf.mxu0
    %v864 = vadd.f32 %v46, %v863
    %865 = vdwg.mxu0
    %v866 = vtanh.pop %v864
    %v868 = vsel %vm72, %v866, 0
    %870 = vmatpush.msra.mxu0 0.0
    %871 = vmatpush.msra.mxu0 0.0
    %872 = vmatpush.msra.mxu0 0.0
    %873 = vmatpush.msra.mxu0 0.0
    %874 = vmatpush.msra.mxu0 0.0
    %875 = vmatpush.msra.mxu0 0.0
    %876 = vmatpush.msra.mxu0 0.0
    %877 = vmatpush.msra.mxu0 0.0
    %878 = vmatpush.msra.mxu0 %v63
    %879 = vmatpush.msra.mxu0 %v62
    %880 = vmatpush.msra.mxu0 %v61
    %881 = vmatpush.msra.mxu0 %v60
    %882 = vmatpush.msra.mxu0 %v59
    %883 = vmatpush.msra.mxu0 %v58
    %884 = vmatpush.msra.mxu0 %v57
    %885 = vmatpush.msra.mxu0 %v56
    %886 = vmatmul.f32.gmra.mxu0 %v868
    %v887 = vpop.f32.mrf.mxu0
    %v888 = vadd.f32 %v67, %v887
    %889 = vdwg.mxu0
    %v890 = vadd.f32 %v842, %v888
    %v892 = vsel %vm72, %v890, 0
    %894 = vmatpush.msra.mxu0 0.0
    %895 = vmatpush.msra.mxu0 0.0
    %896 = vmatpush.msra.mxu0 0.0
    %897 = vmatpush.msra.mxu0 0.0
    %898 = vmatpush.msra.mxu0 0.0
    %899 = vmatpush.msra.mxu0 0.0
    %900 = vmatpush.msra.mxu0 0.0
    %901 = vmatpush.msra.mxu0 0.0
    %902 = vmatpush.msra.mxu0 %v43
    %903 = vmatpush.msra.mxu0 %v42
    %904 = vmatpush.msra.mxu0 %v41
    %905 = vmatpush.msra.mxu0 %v40
    %906 = vmatpush.msra.mxu0 %v39
    %907 = vmatpush.msra.mxu0 %v38
    %908 = vmatpush.msra.mxu0 %v37
    %909 = vmatpush.msra.mxu0 %v36
    %910 = vmatmul.f32.gmra.mxu0 %v892
    %v911 = vpop.f32.mrf.mxu0
    %v912 = vadd.f32 %v46, %v911
    %913 = vdwg.mxu0
    %v914 = vtanh.pop %v912
    %v916 = vsel %vm72, %v914, 0
    %918 = vmatpush.msra.mxu0 0.0
    %919 = vmatpush.msra.mxu0 0.0
    %920 = vmatpush.msra.mxu0 0.0
    %921 = vmatpush.msra.mxu0 0.0
    %922 = vmatpush.msra.mxu0 0.0
    %923 = vmatpush.msra.mxu0 0.0
    %924 = vmatpush.msra.mxu0 0.0
    %925 = vmatpush.msra.mxu0 0.0
    %926 = vmatpush.msra.mxu0 %v63
    %927 = vmatpush.msra.mxu0 %v62
    %928 = vmatpush.msra.mxu0 %v61
    %929 = vmatpush.msra.mxu0 %v60
    %930 = vmatpush.msra.mxu0 %v59
    %931 = vmatpush.msra.mxu0 %v58
    %932 = vmatpush.msra.mxu0 %v57
    %933 = vmatpush.msra.mxu0 %v56
    %934 = vmatmul.f32.gmra.mxu0 %v916
    %v935 = vpop.f32.mrf.mxu0
    %v936 = vadd.f32 %v67, %v935
    %937 = vdwg.mxu0
    %v938 = vadd.f32 %v890, %v936
    %v940 = vsel %vm72, %v938, 0
    %942 = vmatpush.msra.mxu0 0.0
    %943 = vmatpush.msra.mxu0 0.0
    %944 = vmatpush.msra.mxu0 0.0
    %945 = vmatpush.msra.mxu0 0.0
    %946 = vmatpush.msra.mxu0 0.0
    %947 = vmatpush.msra.mxu0 0.0
    %948 = vmatpush.msra.mxu0 0.0
    %949 = vmatpush.msra.mxu0 0.0
    %950 = vmatpush.msra.mxu0 %v43
    %951 = vmatpush.msra.mxu0 %v42
    %952 = vmatpush.msra.mxu0 %v41
    %953 = vmatpush.msra.mxu0 %v40
    %954 = vmatpush.msra.mxu0 %v39
    %955 = vmatpush.msra.mxu0 %v38
    %956 = vmatpush.msra.mxu0 %v37
    %957 = vmatpush.msra.mxu0 %v36
    %958 = vmatmul.f32.gmra.mxu0 %v940
    %v959 = vpop.f32.mrf.mxu0
    %v960 = vadd.f32 %v46, %v959
    %961 = vdwg.mxu0
    %v962 = vtanh.pop %v960
    %v964 = vsel %vm72, %v962, 0
    %966 = vmatpush.msra.mxu0 0.0
    %967 = vmatpush.msra.mxu0 0.0
    %968 = vmatpush.msra.mxu0 0.0
    %969 = vmatpush.msra.mxu0 0.0
    %970 = vmatpush.msra.mxu0 0.0
    %971 = vmatpush.msra.mxu0 0.0
    %972 = vmatpush.msra.mxu0 0.0
    %973 = vmatpush.msra.mxu0 0.0
    %974 = vmatpush.msra.mxu0 %v63
    %975 = vmatpush.msra.mxu0 %v62
    %976 = vmatpush.msra.mxu0 %v61
    %977 = vmatpush.msra.mxu0 %v60
    %978 = vmatpush.msra.mxu0 %v59
    %979 = vmatpush.msra.mxu0 %v58
    %980 = vmatpush.msra.mxu0 %v57
    %981 = vmatpush.msra.mxu0 %v56
    %982 = vmatmul.f32.gmra.mxu0 %v964
    %v983 = vpop.f32.mrf.mxu0
    %v984 = vadd.f32 %v67, %v983
    %985 = vdwg.mxu0
    %v986 = vadd.f32 %v938, %v984
    %v988 = vsel %vm72, %v986, 0
    %990 = vmatpush.msra.mxu0 0.0
    %991 = vmatpush.msra.mxu0 0.0
    %992 = vmatpush.msra.mxu0 0.0
    %993 = vmatpush.msra.mxu0 0.0
    %994 = vmatpush.msra.mxu0 0.0
    %995 = vmatpush.msra.mxu0 0.0
    %996 = vmatpush.msra.mxu0 0.0
    %997 = vmatpush.msra.mxu0 0.0
    %998 = vmatpush.msra.mxu0 %v43
    %999 = vmatpush.msra.mxu0 %v42
    %1000 = vmatpush.msra.mxu0 %v41
    %1001 = vmatpush.msra.mxu0 %v40
    %1002 = vmatpush.msra.mxu0 %v39
    %1003 = vmatpush.msra.mxu0 %v38
    %1004 = vmatpush.msra.mxu0 %v37
    %1005 = vmatpush.msra.mxu0 %v36
    %1006 = vmatmul.f32.gmra.mxu0 %v988
    %v1007 = vpop.f32.mrf.mxu0
    %v1008 = vadd.f32 %v46, %v1007
    %1009 = vdwg.mxu0
    %v1010 = vtanh.pop %v1008
    %v1012 = vsel %vm72, %v1010, 0
    %1014 = vmatpush.msra.mxu0 0.0
    %1015 = vmatpush.msra.mxu0 0.0
    %1016 = vmatpush.msra.mxu0 0.0
    %1017 = vmatpush.msra.mxu0 0.0
    %1018 = vmatpush.msra.mxu0 0.0
    %1019 = vmatpush.msra.mxu0 0.0
    %1020 = vmatpush.msra.mxu0 0.0
    %1021 = vmatpush.msra.mxu0 0.0
    %1022 = vmatpush.msra.mxu0 %v63
    %1023 = vmatpush.msra.mxu0 %v62
    %1024 = vmatpush.msra.mxu0 %v61
    %1025 = vmatpush.msra.mxu0 %v60
    %1026 = vmatpush.msra.mxu0 %v59
    %1027 = vmatpush.msra.mxu0 %v58
    %1028 = vmatpush.msra.mxu0 %v57
    %1029 = vmatpush.msra.mxu0 %v56
    %1030 = vmatmul.f32.gmra.mxu0 %v1012
    %v1031 = vpop.f32.mrf.mxu0
    %v1032 = vadd.f32 %v67, %v1031
    %1033 = vdwg.mxu0
    %v1034 = vadd.f32 %v986, %v1032
    %s1035 = scalar_lea.vmem %s5, 4
    %1036 = vst.msk [vmem:[%s1035] sm:$0x3] %vm70, %v1034
    %v1038 = vsel %vm72, %v1034, 0
    %1040 = vmatpush.msra.mxu0 0.0
    %1041 = vmatpush.msra.mxu0 0.0
    %1042 = vmatpush.msra.mxu0 0.0
    %1043 = vmatpush.msra.mxu0 0.0
    %1044 = vmatpush.msra.mxu0 0.0
    %1045 = vmatpush.msra.mxu0 0.0
    %1046 = vmatpush.msra.mxu0 0.0
    %1047 = vmatpush.msra.mxu0 0.0
    %1048 = vmatpush.msra.mxu0 %v43
    %1049 = vmatpush.msra.mxu0 %v42
    %1050 = vmatpush.msra.mxu0 %v41
    %1051 = vmatpush.msra.mxu0 %v40
    %1052 = vmatpush.msra.mxu0 %v39
    %1053 = vmatpush.msra.mxu0 %v38
    %1054 = vmatpush.msra.mxu0 %v37
    %1055 = vmatpush.msra.mxu0 %v36
    %1056 = vmatmul.f32.gmra.mxu0 %v1038
    %v1057 = vpop.f32.mrf.mxu0
    %v1058 = vadd.f32 %v46, %v1057
    %1059 = vdwg.mxu0
    %v1060 = vtanh.pop %v1058
    %v1062 = vsel %vm72, %v1060, 0
    %1064 = vmatpush.msra.mxu0 0.0
    %1065 = vmatpush.msra.mxu0 0.0
    %1066 = vmatpush.msra.mxu0 0.0
    %1067 = vmatpush.msra.mxu0 0.0
    %1068 = vmatpush.msra.mxu0 0.0
    %1069 = vmatpush.msra.mxu0 0.0
    %1070 = vmatpush.msra.mxu0 0.0
    %1071 = vmatpush.msra.mxu0 0.0
    %1072 = vmatpush.msra.mxu0 %v63
    %1073 = vmatpush.msra.mxu0 %v62
    %1074 = vmatpush.msra.mxu0 %v61
    %1075 = vmatpush.msra.mxu0 %v60
    %1076 = vmatpush.msra.mxu0 %v59
    %1077 = vmatpush.msra.mxu0 %v58
    %1078 = vmatpush.msra.mxu0 %v57
    %1079 = vmatpush.msra.mxu0 %v56
    %1080 = vmatmul.f32.gmra.mxu0 %v1062
    %v1081 = vpop.f32.mrf.mxu0
    %v1082 = vadd.f32 %v67, %v1081
    %1083 = vdwg.mxu0
    %v1084 = vadd.f32 %v1034, %v1082
    %v1086 = vsel %vm72, %v1084, 0
    %1088 = vmatpush.msra.mxu0 0.0
    %1089 = vmatpush.msra.mxu0 0.0
    %1090 = vmatpush.msra.mxu0 0.0
    %1091 = vmatpush.msra.mxu0 0.0
    %1092 = vmatpush.msra.mxu0 0.0
    %1093 = vmatpush.msra.mxu0 0.0
    %1094 = vmatpush.msra.mxu0 0.0
    %1095 = vmatpush.msra.mxu0 0.0
    %1096 = vmatpush.msra.mxu0 %v43
    %1097 = vmatpush.msra.mxu0 %v42
    %1098 = vmatpush.msra.mxu0 %v41
    %1099 = vmatpush.msra.mxu0 %v40
    %1100 = vmatpush.msra.mxu0 %v39
    %1101 = vmatpush.msra.mxu0 %v38
    %1102 = vmatpush.msra.mxu0 %v37
    %1103 = vmatpush.msra.mxu0 %v36
    %1104 = vmatmul.f32.gmra.mxu0 %v1086
    %v1105 = vpop.f32.mrf.mxu0
    %v1106 = vadd.f32 %v46, %v1105
    %1107 = vdwg.mxu0
    %v1108 = vtanh.pop %v1106
    %v1110 = vsel %vm72, %v1108, 0
    %1112 = vmatpush.msra.mxu0 0.0
    %1113 = vmatpush.msra.mxu0 0.0
    %1114 = vmatpush.msra.mxu0 0.0
    %1115 = vmatpush.msra.mxu0 0.0
    %1116 = vmatpush.msra.mxu0 0.0
    %1117 = vmatpush.msra.mxu0 0.0
    %1118 = vmatpush.msra.mxu0 0.0
    %1119 = vmatpush.msra.mxu0 0.0
    %1120 = vmatpush.msra.mxu0 %v63
    %1121 = vmatpush.msra.mxu0 %v62
    %1122 = vmatpush.msra.mxu0 %v61
    %1123 = vmatpush.msra.mxu0 %v60
    %1124 = vmatpush.msra.mxu0 %v59
    %1125 = vmatpush.msra.mxu0 %v58
    %1126 = vmatpush.msra.mxu0 %v57
    %1127 = vmatpush.msra.mxu0 %v56
    %1128 = vmatmul.f32.gmra.mxu0 %v1110
    %v1129 = vpop.f32.mrf.mxu0
    %v1130 = vadd.f32 %v67, %v1129
    %1131 = vdwg.mxu0
    %v1132 = vadd.f32 %v1084, %v1130
    %v1134 = vsel %vm72, %v1132, 0
    %1136 = vmatpush.msra.mxu0 0.0
    %1137 = vmatpush.msra.mxu0 0.0
    %1138 = vmatpush.msra.mxu0 0.0
    %1139 = vmatpush.msra.mxu0 0.0
    %1140 = vmatpush.msra.mxu0 0.0
    %1141 = vmatpush.msra.mxu0 0.0
    %1142 = vmatpush.msra.mxu0 0.0
    %1143 = vmatpush.msra.mxu0 0.0
    %1144 = vmatpush.msra.mxu0 %v43
    %1145 = vmatpush.msra.mxu0 %v42
    %1146 = vmatpush.msra.mxu0 %v41
    %1147 = vmatpush.msra.mxu0 %v40
    %1148 = vmatpush.msra.mxu0 %v39
    %1149 = vmatpush.msra.mxu0 %v38
    %1150 = vmatpush.msra.mxu0 %v37
    %1151 = vmatpush.msra.mxu0 %v36
    %1152 = vmatmul.f32.gmra.mxu0 %v1134
    %v1153 = vpop.f32.mrf.mxu0
    %v1154 = vadd.f32 %v46, %v1153
    %1155 = vdwg.mxu0
    %v1156 = vtanh.pop %v1154
    %v1158 = vsel %vm72, %v1156, 0
    %1160 = vmatpush.msra.mxu0 0.0
    %1161 = vmatpush.msra.mxu0 0.0
    %1162 = vmatpush.msra.mxu0 0.0
    %1163 = vmatpush.msra.mxu0 0.0
    %1164 = vmatpush.msra.mxu0 0.0
    %1165 = vmatpush.msra.mxu0 0.0
    %1166 = vmatpush.msra.mxu0 0.0
    %1167 = vmatpush.msra.mxu0 0.0
    %1168 = vmatpush.msra.mxu0 %v63
    %1169 = vmatpush.msra.mxu0 %v62
    %1170 = vmatpush.msra.mxu0 %v61
    %1171 = vmatpush.msra.mxu0 %v60
    %1172 = vmatpush.msra.mxu0 %v59
    %1173 = vmatpush.msra.mxu0 %v58
    %1174 = vmatpush.msra.mxu0 %v57
    %1175 = vmatpush.msra.mxu0 %v56
    %1176 = vmatmul.f32.gmra.mxu0 %v1158
    %v1177 = vpop.f32.mrf.mxu0
    %v1178 = vadd.f32 %v67, %v1177
    %1179 = vdwg.mxu0
    %v1180 = vadd.f32 %v1132, %v1178
    %v1182 = vsel %vm72, %v1180, 0
    %1184 = vmatpush.msra.mxu0 0.0
    %1185 = vmatpush.msra.mxu0 0.0
    %1186 = vmatpush.msra.mxu0 0.0
    %1187 = vmatpush.msra.mxu0 0.0
    %1188 = vmatpush.msra.mxu0 0.0
    %1189 = vmatpush.msra.mxu0 0.0
    %1190 = vmatpush.msra.mxu0 0.0
    %1191 = vmatpush.msra.mxu0 0.0
    %1192 = vmatpush.msra.mxu0 %v43
    %1193 = vmatpush.msra.mxu0 %v42
    %1194 = vmatpush.msra.mxu0 %v41
    %1195 = vmatpush.msra.mxu0 %v40
    %1196 = vmatpush.msra.mxu0 %v39
    %1197 = vmatpush.msra.mxu0 %v38
    %1198 = vmatpush.msra.mxu0 %v37
    %1199 = vmatpush.msra.mxu0 %v36
    %1200 = vmatmul.f32.gmra.mxu0 %v1182
    %v1201 = vpop.f32.mrf.mxu0
    %v1202 = vadd.f32 %v46, %v1201
    %1203 = vdwg.mxu0
    %v1204 = vtanh.pop %v1202
    %v1206 = vsel %vm72, %v1204, 0
    %1208 = vmatpush.msra.mxu0 0.0
    %1209 = vmatpush.msra.mxu0 0.0
    %1210 = vmatpush.msra.mxu0 0.0
    %1211 = vmatpush.msra.mxu0 0.0
    %1212 = vmatpush.msra.mxu0 0.0
    %1213 = vmatpush.msra.mxu0 0.0
    %1214 = vmatpush.msra.mxu0 0.0
    %1215 = vmatpush.msra.mxu0 0.0
    %1216 = vmatpush.msra.mxu0 %v63
    %1217 = vmatpush.msra.mxu0 %v62
    %1218 = vmatpush.msra.mxu0 %v61
    %1219 = vmatpush.msra.mxu0 %v60
    %1220 = vmatpush.msra.mxu0 %v59
    %1221 = vmatpush.msra.mxu0 %v58
    %1222 = vmatpush.msra.mxu0 %v57
    %1223 = vmatpush.msra.mxu0 %v56
    %1224 = vmatmul.f32.gmra.mxu0 %v1206
    %v1225 = vpop.f32.mrf.mxu0
    %v1226 = vadd.f32 %v67, %v1225
    %1227 = vdwg.mxu0
    %v1228 = vadd.f32 %v1180, %v1226
    %v1230 = vsel %vm72, %v1228, 0
    %1232 = vmatpush.msra.mxu0 0.0
    %1233 = vmatpush.msra.mxu0 0.0
    %1234 = vmatpush.msra.mxu0 0.0
    %1235 = vmatpush.msra.mxu0 0.0
    %1236 = vmatpush.msra.mxu0 0.0
    %1237 = vmatpush.msra.mxu0 0.0
    %1238 = vmatpush.msra.mxu0 0.0
    %1239 = vmatpush.msra.mxu0 0.0
    %1240 = vmatpush.msra.mxu0 %v43
    %1241 = vmatpush.msra.mxu0 %v42
    %1242 = vmatpush.msra.mxu0 %v41
    %1243 = vmatpush.msra.mxu0 %v40
    %1244 = vmatpush.msra.mxu0 %v39
    %1245 = vmatpush.msra.mxu0 %v38
    %1246 = vmatpush.msra.mxu0 %v37
    %1247 = vmatpush.msra.mxu0 %v36
    %1248 = vmatmul.f32.gmra.mxu0 %v1230
    %v1249 = vpop.f32.mrf.mxu0
    %v1250 = vadd.f32 %v46, %v1249
    %1251 = vdwg.mxu0
    %v1252 = vtanh.pop %v1250
    %v1254 = vsel %vm72, %v1252, 0
    %1256 = vmatpush.msra.mxu0 0.0
    %1257 = vmatpush.msra.mxu0 0.0
    %1258 = vmatpush.msra.mxu0 0.0
    %1259 = vmatpush.msra.mxu0 0.0
    %1260 = vmatpush.msra.mxu0 0.0
    %1261 = vmatpush.msra.mxu0 0.0
    %1262 = vmatpush.msra.mxu0 0.0
    %1263 = vmatpush.msra.mxu0 0.0
    %1264 = vmatpush.msra.mxu0 %v63
    %1265 = vmatpush.msra.mxu0 %v62
    %1266 = vmatpush.msra.mxu0 %v61
    %1267 = vmatpush.msra.mxu0 %v60
    %1268 = vmatpush.msra.mxu0 %v59
    %1269 = vmatpush.msra.mxu0 %v58
    %1270 = vmatpush.msra.mxu0 %v57
    %1271 = vmatpush.msra.mxu0 %v56
    %1272 = vmatmul.f32.gmra.mxu0 %v1254
    %v1273 = vpop.f32.mrf.mxu0
    %v1274 = vadd.f32 %v67, %v1273
    %1275 = vdwg.mxu0
    %v1276 = vadd.f32 %v1228, %v1274
    %v1278 = vsel %vm72, %v1276, 0
    %1280 = vmatpush.msra.mxu0 0.0
    %1281 = vmatpush.msra.mxu0 0.0
    %1282 = vmatpush.msra.mxu0 0.0
    %1283 = vmatpush.msra.mxu0 0.0
    %1284 = vmatpush.msra.mxu0 0.0
    %1285 = vmatpush.msra.mxu0 0.0
    %1286 = vmatpush.msra.mxu0 0.0
    %1287 = vmatpush.msra.mxu0 0.0
    %1288 = vmatpush.msra.mxu0 %v43
    %1289 = vmatpush.msra.mxu0 %v42
    %1290 = vmatpush.msra.mxu0 %v41
    %1291 = vmatpush.msra.mxu0 %v40
    %1292 = vmatpush.msra.mxu0 %v39
    %1293 = vmatpush.msra.mxu0 %v38
    %1294 = vmatpush.msra.mxu0 %v37
    %1295 = vmatpush.msra.mxu0 %v36
    %1296 = vmatmul.f32.gmra.mxu0 %v1278
    %v1297 = vpop.f32.mrf.mxu0
    %v1298 = vadd.f32 %v46, %v1297
    %1299 = vdwg.mxu0
    %v1300 = vtanh.pop %v1298
    %v1302 = vsel %vm72, %v1300, 0
    %1304 = vmatpush.msra.mxu0 0.0
    %1305 = vmatpush.msra.mxu0 0.0
    %1306 = vmatpush.msra.mxu0 0.0
    %1307 = vmatpush.msra.mxu0 0.0
    %1308 = vmatpush.msra.mxu0 0.0
    %1309 = vmatpush.msra.mxu0 0.0
    %1310 = vmatpush.msra.mxu0 0.0
    %1311 = vmatpush.msra.mxu0 0.0
    %1312 = vmatpush.msra.mxu0 %v63
    %1313 = vmatpush.msra.mxu0 %v62
    %1314 = vmatpush.msra.mxu0 %v61
    %1315 = vmatpush.msra.mxu0 %v60
    %1316 = vmatpush.msra.mxu0 %v59
    %1317 = vmatpush.msra.mxu0 %v58
    %1318 = vmatpush.msra.mxu0 %v57
    %1319 = vmatpush.msra.mxu0 %v56
    %1320 = vmatmul.f32.gmra.mxu0 %v1302
    %v1321 = vpop.f32.mrf.mxu0
    %v1322 = vadd.f32 %v67, %v1321
    %1323 = vdwg.mxu0
    %v1324 = vadd.f32 %v1276, %v1322
    %v1326 = vsel %vm72, %v1324, 0
    %1328 = vmatpush.msra.mxu0 0.0
    %1329 = vmatpush.msra.mxu0 0.0
    %1330 = vmatpush.msra.mxu0 0.0
    %1331 = vmatpush.msra.mxu0 0.0
    %1332 = vmatpush.msra.mxu0 0.0
    %1333 = vmatpush.msra.mxu0 0.0
    %1334 = vmatpush.msra.mxu0 0.0
    %1335 = vmatpush.msra.mxu0 0.0
    %1336 = vmatpush.msra.mxu0 %v43
    %1337 = vmatpush.msra.mxu0 %v42
    %1338 = vmatpush.msra.mxu0 %v41
    %1339 = vmatpush.msra.mxu0 %v40
    %1340 = vmatpush.msra.mxu0 %v39
    %1341 = vmatpush.msra.mxu0 %v38
    %1342 = vmatpush.msra.mxu0 %v37
    %1343 = vmatpush.msra.mxu0 %v36
    %1344 = vmatmul.f32.gmra.mxu0 %v1326
    %v1345 = vpop.f32.mrf.mxu0
    %v1346 = vadd.f32 %v46, %v1345
    %1347 = vdwg.mxu0
    %v1348 = vtanh.pop %v1346
    %v1350 = vsel %vm72, %v1348, 0
    %1352 = vmatpush.msra.mxu0 0.0
    %1353 = vmatpush.msra.mxu0 0.0
    %1354 = vmatpush.msra.mxu0 0.0
    %1355 = vmatpush.msra.mxu0 0.0
    %1356 = vmatpush.msra.mxu0 0.0
    %1357 = vmatpush.msra.mxu0 0.0
    %1358 = vmatpush.msra.mxu0 0.0
    %1359 = vmatpush.msra.mxu0 0.0
    %1360 = vmatpush.msra.mxu0 %v63
    %1361 = vmatpush.msra.mxu0 %v62
    %1362 = vmatpush.msra.mxu0 %v61
    %1363 = vmatpush.msra.mxu0 %v60
    %1364 = vmatpush.msra.mxu0 %v59
    %1365 = vmatpush.msra.mxu0 %v58
    %1366 = vmatpush.msra.mxu0 %v57
    %1367 = vmatpush.msra.mxu0 %v56
    %1368 = vmatmul.f32.gmra.mxu0 %v1350
    %v1369 = vpop.f32.mrf.mxu0
    %v1370 = vadd.f32 %v67, %v1369
    %1371 = vdwg.mxu0
    %v1372 = vadd.f32 %v1324, %v1370
    %v1374 = vsel %vm72, %v1372, 0
    %1376 = vmatpush.msra.mxu0 0.0
    %1377 = vmatpush.msra.mxu0 0.0
    %1378 = vmatpush.msra.mxu0 0.0
    %1379 = vmatpush.msra.mxu0 0.0
    %1380 = vmatpush.msra.mxu0 0.0
    %1381 = vmatpush.msra.mxu0 0.0
    %1382 = vmatpush.msra.mxu0 0.0
    %1383 = vmatpush.msra.mxu0 0.0
    %1384 = vmatpush.msra.mxu0 %v43
    %1385 = vmatpush.msra.mxu0 %v42
    %1386 = vmatpush.msra.mxu0 %v41
    %1387 = vmatpush.msra.mxu0 %v40
    %1388 = vmatpush.msra.mxu0 %v39
    %1389 = vmatpush.msra.mxu0 %v38
    %1390 = vmatpush.msra.mxu0 %v37
    %1391 = vmatpush.msra.mxu0 %v36
    %1392 = vmatmul.f32.gmra.mxu0 %v1374
    %v1393 = vpop.f32.mrf.mxu0
    %v1394 = vadd.f32 %v46, %v1393
    %1395 = vdwg.mxu0
    %v1396 = vtanh.pop %v1394
    %v1398 = vsel %vm72, %v1396, 0
    %1400 = vmatpush.msra.mxu0 0.0
    %1401 = vmatpush.msra.mxu0 0.0
    %1402 = vmatpush.msra.mxu0 0.0
    %1403 = vmatpush.msra.mxu0 0.0
    %1404 = vmatpush.msra.mxu0 0.0
    %1405 = vmatpush.msra.mxu0 0.0
    %1406 = vmatpush.msra.mxu0 0.0
    %1407 = vmatpush.msra.mxu0 0.0
    %1408 = vmatpush.msra.mxu0 %v63
    %1409 = vmatpush.msra.mxu0 %v62
    %1410 = vmatpush.msra.mxu0 %v61
    %1411 = vmatpush.msra.mxu0 %v60
    %1412 = vmatpush.msra.mxu0 %v59
    %1413 = vmatpush.msra.mxu0 %v58
    %1414 = vmatpush.msra.mxu0 %v57
    %1415 = vmatpush.msra.mxu0 %v56
    %1416 = vmatmul.f32.gmra.mxu0 %v1398
    %v1417 = vpop.f32.mrf.mxu0
    %v1418 = vadd.f32 %v67, %v1417
    %1419 = vdwg.mxu0
    %v1420 = vadd.f32 %v1372, %v1418
    %v1422 = vsel %vm72, %v1420, 0
    %1424 = vmatpush.msra.mxu0 0.0
    %1425 = vmatpush.msra.mxu0 0.0
    %1426 = vmatpush.msra.mxu0 0.0
    %1427 = vmatpush.msra.mxu0 0.0
    %1428 = vmatpush.msra.mxu0 0.0
    %1429 = vmatpush.msra.mxu0 0.0
    %1430 = vmatpush.msra.mxu0 0.0
    %1431 = vmatpush.msra.mxu0 0.0
    %1432 = vmatpush.msra.mxu0 %v43
    %1433 = vmatpush.msra.mxu0 %v42
    %1434 = vmatpush.msra.mxu0 %v41
    %1435 = vmatpush.msra.mxu0 %v40
    %1436 = vmatpush.msra.mxu0 %v39
    %1437 = vmatpush.msra.mxu0 %v38
    %1438 = vmatpush.msra.mxu0 %v37
    %1439 = vmatpush.msra.mxu0 %v36
    %1440 = vmatmul.f32.gmra.mxu0 %v1422
    %v1441 = vpop.f32.mrf.mxu0
    %v1442 = vadd.f32 %v46, %v1441
    %1443 = vdwg.mxu0
    %v1444 = vtanh.pop %v1442
    %v1446 = vsel %vm72, %v1444, 0
    %1448 = vmatpush.msra.mxu0 0.0
    %1449 = vmatpush.msra.mxu0 0.0
    %1450 = vmatpush.msra.mxu0 0.0
    %1451 = vmatpush.msra.mxu0 0.0
    %1452 = vmatpush.msra.mxu0 0.0
    %1453 = vmatpush.msra.mxu0 0.0
    %1454 = vmatpush.msra.mxu0 0.0
    %1455 = vmatpush.msra.mxu0 0.0
    %1456 = vmatpush.msra.mxu0 %v63
    %1457 = vmatpush.msra.mxu0 %v62
    %1458 = vmatpush.msra.mxu0 %v61
    %1459 = vmatpush.msra.mxu0 %v60
    %1460 = vmatpush.msra.mxu0 %v59
    %1461 = vmatpush.msra.mxu0 %v58
    %1462 = vmatpush.msra.mxu0 %v57
    %1463 = vmatpush.msra.mxu0 %v56
    %1464 = vmatmul.f32.gmra.mxu0 %v1446
    %v1465 = vpop.f32.mrf.mxu0
    %v1466 = vadd.f32 %v67, %v1465
    %1467 = vdwg.mxu0
    %v1468 = vadd.f32 %v1420, %v1466
    %v1470 = vsel %vm72, %v1468, 0
    %1472 = vmatpush.msra.mxu0 0.0
    %1473 = vmatpush.msra.mxu0 0.0
    %1474 = vmatpush.msra.mxu0 0.0
    %1475 = vmatpush.msra.mxu0 0.0
    %1476 = vmatpush.msra.mxu0 0.0
    %1477 = vmatpush.msra.mxu0 0.0
    %1478 = vmatpush.msra.mxu0 0.0
    %1479 = vmatpush.msra.mxu0 0.0
    %1480 = vmatpush.msra.mxu0 %v43
    %1481 = vmatpush.msra.mxu0 %v42
    %1482 = vmatpush.msra.mxu0 %v41
    %1483 = vmatpush.msra.mxu0 %v40
    %1484 = vmatpush.msra.mxu0 %v39
    %1485 = vmatpush.msra.mxu0 %v38
    %1486 = vmatpush.msra.mxu0 %v37
    %1487 = vmatpush.msra.mxu0 %v36
    %1488 = vmatmul.f32.gmra.mxu0 %v1470
    %v1489 = vpop.f32.mrf.mxu0
    %v1490 = vadd.f32 %v46, %v1489
    %1491 = vdwg.mxu0
    %v1492 = vtanh.pop %v1490
    %v1494 = vsel %vm72, %v1492, 0
    %1496 = vmatpush.msra.mxu0 0.0
    %1497 = vmatpush.msra.mxu0 0.0
    %1498 = vmatpush.msra.mxu0 0.0
    %1499 = vmatpush.msra.mxu0 0.0
    %1500 = vmatpush.msra.mxu0 0.0
    %1501 = vmatpush.msra.mxu0 0.0
    %1502 = vmatpush.msra.mxu0 0.0
    %1503 = vmatpush.msra.mxu0 0.0
    %1504 = vmatpush.msra.mxu0 %v63
    %1505 = vmatpush.msra.mxu0 %v62
    %1506 = vmatpush.msra.mxu0 %v61
    %1507 = vmatpush.msra.mxu0 %v60
    %1508 = vmatpush.msra.mxu0 %v59
    %1509 = vmatpush.msra.mxu0 %v58
    %1510 = vmatpush.msra.mxu0 %v57
    %1511 = vmatpush.msra.mxu0 %v56
    %1512 = vmatmul.f32.gmra.mxu0 %v1494
    %v1513 = vpop.f32.mrf.mxu0
    %v1514 = vadd.f32 %v67, %v1513
    %1515 = vdwg.mxu0
    %v1516 = vadd.f32 %v1468, %v1514
    %s1517 = scalar_lea.vmem %s5, 6
    %1518 = vst.msk [vmem:[%s1517] sm:$0x3] %vm70, %v1516
    %v1520 = vsel %vm72, %v1516, 0
    %1522 = vmatpush.msra.mxu0 0.0
    %1523 = vmatpush.msra.mxu0 0.0
    %1524 = vmatpush.msra.mxu0 0.0
    %1525 = vmatpush.msra.mxu0 0.0
    %1526 = vmatpush.msra.mxu0 0.0
    %1527 = vmatpush.msra.mxu0 0.0
    %1528 = vmatpush.msra.mxu0 0.0
    %1529 = vmatpush.msra.mxu0 0.0
    %1530 = vmatpush.msra.mxu0 %v43
    %1531 = vmatpush.msra.mxu0 %v42
    %1532 = vmatpush.msra.mxu0 %v41
    %1533 = vmatpush.msra.mxu0 %v40
    %1534 = vmatpush.msra.mxu0 %v39
    %1535 = vmatpush.msra.mxu0 %v38
    %1536 = vmatpush.msra.mxu0 %v37
    %1537 = vmatpush.msra.mxu0 %v36
    %1538 = vmatmul.f32.gmra.mxu0 %v1520
    %v1539 = vpop.f32.mrf.mxu0
    %v1540 = vadd.f32 %v46, %v1539
    %1541 = vdwg.mxu0
    %v1542 = vtanh.pop %v1540
    %v1544 = vsel %vm72, %v1542, 0
    %1546 = vmatpush.msra.mxu0 0.0
    %1547 = vmatpush.msra.mxu0 0.0
    %1548 = vmatpush.msra.mxu0 0.0
    %1549 = vmatpush.msra.mxu0 0.0
    %1550 = vmatpush.msra.mxu0 0.0
    %1551 = vmatpush.msra.mxu0 0.0
    %1552 = vmatpush.msra.mxu0 0.0
    %1553 = vmatpush.msra.mxu0 0.0
    %1554 = vmatpush.msra.mxu0 %v63
    %1555 = vmatpush.msra.mxu0 %v62
    %1556 = vmatpush.msra.mxu0 %v61
    %1557 = vmatpush.msra.mxu0 %v60
    %1558 = vmatpush.msra.mxu0 %v59
    %1559 = vmatpush.msra.mxu0 %v58
    %1560 = vmatpush.msra.mxu0 %v57
    %1561 = vmatpush.msra.mxu0 %v56
    %1562 = vmatmul.f32.gmra.mxu0 %v1544
    %v1563 = vpop.f32.mrf.mxu0
    %v1564 = vadd.f32 %v67, %v1563
    %1565 = vdwg.mxu0
    %v1566 = vadd.f32 %v1516, %v1564
    %v1568 = vsel %vm72, %v1566, 0
    %1570 = vmatpush.msra.mxu0 0.0
    %1571 = vmatpush.msra.mxu0 0.0
    %1572 = vmatpush.msra.mxu0 0.0
    %1573 = vmatpush.msra.mxu0 0.0
    %1574 = vmatpush.msra.mxu0 0.0
    %1575 = vmatpush.msra.mxu0 0.0
    %1576 = vmatpush.msra.mxu0 0.0
    %1577 = vmatpush.msra.mxu0 0.0
    %1578 = vmatpush.msra.mxu0 %v43
    %1579 = vmatpush.msra.mxu0 %v42
    %1580 = vmatpush.msra.mxu0 %v41
    %1581 = vmatpush.msra.mxu0 %v40
    %1582 = vmatpush.msra.mxu0 %v39
    %1583 = vmatpush.msra.mxu0 %v38
    %1584 = vmatpush.msra.mxu0 %v37
    %1585 = vmatpush.msra.mxu0 %v36
    %1586 = vmatmul.f32.gmra.mxu0 %v1568
    %v1587 = vpop.f32.mrf.mxu0
    %v1588 = vadd.f32 %v46, %v1587
    %1589 = vdwg.mxu0
    %v1590 = vtanh.pop %v1588
    %v1592 = vsel %vm72, %v1590, 0
    %1594 = vmatpush.msra.mxu0 0.0
    %1595 = vmatpush.msra.mxu0 0.0
    %1596 = vmatpush.msra.mxu0 0.0
    %1597 = vmatpush.msra.mxu0 0.0
    %1598 = vmatpush.msra.mxu0 0.0
    %1599 = vmatpush.msra.mxu0 0.0
    %1600 = vmatpush.msra.mxu0 0.0
    %1601 = vmatpush.msra.mxu0 0.0
    %1602 = vmatpush.msra.mxu0 %v63
    %1603 = vmatpush.msra.mxu0 %v62
    %1604 = vmatpush.msra.mxu0 %v61
    %1605 = vmatpush.msra.mxu0 %v60
    %1606 = vmatpush.msra.mxu0 %v59
    %1607 = vmatpush.msra.mxu0 %v58
    %1608 = vmatpush.msra.mxu0 %v57
    %1609 = vmatpush.msra.mxu0 %v56
    %1610 = vmatmul.f32.gmra.mxu0 %v1592
    %v1611 = vpop.f32.mrf.mxu0
    %v1612 = vadd.f32 %v67, %v1611
    %1613 = vdwg.mxu0
    %v1614 = vadd.f32 %v1566, %v1612
    %v1616 = vsel %vm72, %v1614, 0
    %1618 = vmatpush.msra.mxu0 0.0
    %1619 = vmatpush.msra.mxu0 0.0
    %1620 = vmatpush.msra.mxu0 0.0
    %1621 = vmatpush.msra.mxu0 0.0
    %1622 = vmatpush.msra.mxu0 0.0
    %1623 = vmatpush.msra.mxu0 0.0
    %1624 = vmatpush.msra.mxu0 0.0
    %1625 = vmatpush.msra.mxu0 0.0
    %1626 = vmatpush.msra.mxu0 %v43
    %1627 = vmatpush.msra.mxu0 %v42
    %1628 = vmatpush.msra.mxu0 %v41
    %1629 = vmatpush.msra.mxu0 %v40
    %1630 = vmatpush.msra.mxu0 %v39
    %1631 = vmatpush.msra.mxu0 %v38
    %1632 = vmatpush.msra.mxu0 %v37
    %1633 = vmatpush.msra.mxu0 %v36
    %1634 = vmatmul.f32.gmra.mxu0 %v1616
    %v1635 = vpop.f32.mrf.mxu0
    %v1636 = vadd.f32 %v46, %v1635
    %1637 = vdwg.mxu0
    %v1638 = vtanh.pop %v1636
    %v1640 = vsel %vm72, %v1638, 0
    %1642 = vmatpush.msra.mxu0 0.0
    %1643 = vmatpush.msra.mxu0 0.0
    %1644 = vmatpush.msra.mxu0 0.0
    %1645 = vmatpush.msra.mxu0 0.0
    %1646 = vmatpush.msra.mxu0 0.0
    %1647 = vmatpush.msra.mxu0 0.0
    %1648 = vmatpush.msra.mxu0 0.0
    %1649 = vmatpush.msra.mxu0 0.0
    %1650 = vmatpush.msra.mxu0 %v63
    %1651 = vmatpush.msra.mxu0 %v62
    %1652 = vmatpush.msra.mxu0 %v61
    %1653 = vmatpush.msra.mxu0 %v60
    %1654 = vmatpush.msra.mxu0 %v59
    %1655 = vmatpush.msra.mxu0 %v58
    %1656 = vmatpush.msra.mxu0 %v57
    %1657 = vmatpush.msra.mxu0 %v56
    %1658 = vmatmul.f32.gmra.mxu0 %v1640
    %v1659 = vpop.f32.mrf.mxu0
    %v1660 = vadd.f32 %v67, %v1659
    %1661 = vdwg.mxu0
    %v1662 = vadd.f32 %v1614, %v1660
    %v1664 = vsel %vm72, %v1662, 0
    %1666 = vmatpush.msra.mxu0 0.0
    %1667 = vmatpush.msra.mxu0 0.0
    %1668 = vmatpush.msra.mxu0 0.0
    %1669 = vmatpush.msra.mxu0 0.0
    %1670 = vmatpush.msra.mxu0 0.0
    %1671 = vmatpush.msra.mxu0 0.0
    %1672 = vmatpush.msra.mxu0 0.0
    %1673 = vmatpush.msra.mxu0 0.0
    %1674 = vmatpush.msra.mxu0 %v43
    %1675 = vmatpush.msra.mxu0 %v42
    %1676 = vmatpush.msra.mxu0 %v41
    %1677 = vmatpush.msra.mxu0 %v40
    %1678 = vmatpush.msra.mxu0 %v39
    %1679 = vmatpush.msra.mxu0 %v38
    %1680 = vmatpush.msra.mxu0 %v37
    %1681 = vmatpush.msra.mxu0 %v36
    %1682 = vmatmul.f32.gmra.mxu0 %v1664
    %v1683 = vpop.f32.mrf.mxu0
    %v1684 = vadd.f32 %v46, %v1683
    %1685 = vdwg.mxu0
    %v1686 = vtanh.pop %v1684
    %v1688 = vsel %vm72, %v1686, 0
    %1690 = vmatpush.msra.mxu0 0.0
    %1691 = vmatpush.msra.mxu0 0.0
    %1692 = vmatpush.msra.mxu0 0.0
    %1693 = vmatpush.msra.mxu0 0.0
    %1694 = vmatpush.msra.mxu0 0.0
    %1695 = vmatpush.msra.mxu0 0.0
    %1696 = vmatpush.msra.mxu0 0.0
    %1697 = vmatpush.msra.mxu0 0.0
    %1698 = vmatpush.msra.mxu0 %v63
    %1699 = vmatpush.msra.mxu0 %v62
    %1700 = vmatpush.msra.mxu0 %v61
    %1701 = vmatpush.msra.mxu0 %v60
    %1702 = vmatpush.msra.mxu0 %v59
    %1703 = vmatpush.msra.mxu0 %v58
    %1704 = vmatpush.msra.mxu0 %v57
    %1705 = vmatpush.msra.mxu0 %v56
    %1706 = vmatmul.f32.gmra.mxu0 %v1688
    %v1707 = vpop.f32.mrf.mxu0
    %v1708 = vadd.f32 %v67, %v1707
    %1709 = vdwg.mxu0
    %v1710 = vadd.f32 %v1662, %v1708
    %v1712 = vsel %vm72, %v1710, 0
    %1714 = vmatpush.msra.mxu0 0.0
    %1715 = vmatpush.msra.mxu0 0.0
    %1716 = vmatpush.msra.mxu0 0.0
    %1717 = vmatpush.msra.mxu0 0.0
    %1718 = vmatpush.msra.mxu0 0.0
    %1719 = vmatpush.msra.mxu0 0.0
    %1720 = vmatpush.msra.mxu0 0.0
    %1721 = vmatpush.msra.mxu0 0.0
    %1722 = vmatpush.msra.mxu0 %v43
    %1723 = vmatpush.msra.mxu0 %v42
    %1724 = vmatpush.msra.mxu0 %v41
    %1725 = vmatpush.msra.mxu0 %v40
    %1726 = vmatpush.msra.mxu0 %v39
    %1727 = vmatpush.msra.mxu0 %v38
    %1728 = vmatpush.msra.mxu0 %v37
    %1729 = vmatpush.msra.mxu0 %v36
    %1730 = vmatmul.f32.gmra.mxu0 %v1712
    %v1731 = vpop.f32.mrf.mxu0
    %v1732 = vadd.f32 %v46, %v1731
    %1733 = vdwg.mxu0
    %v1734 = vtanh.pop %v1732
    %v1736 = vsel %vm72, %v1734, 0
    %1738 = vmatpush.msra.mxu0 0.0
    %1739 = vmatpush.msra.mxu0 0.0
    %1740 = vmatpush.msra.mxu0 0.0
    %1741 = vmatpush.msra.mxu0 0.0
    %1742 = vmatpush.msra.mxu0 0.0
    %1743 = vmatpush.msra.mxu0 0.0
    %1744 = vmatpush.msra.mxu0 0.0
    %1745 = vmatpush.msra.mxu0 0.0
    %1746 = vmatpush.msra.mxu0 %v63
    %1747 = vmatpush.msra.mxu0 %v62
    %1748 = vmatpush.msra.mxu0 %v61
    %1749 = vmatpush.msra.mxu0 %v60
    %1750 = vmatpush.msra.mxu0 %v59
    %1751 = vmatpush.msra.mxu0 %v58
    %1752 = vmatpush.msra.mxu0 %v57
    %1753 = vmatpush.msra.mxu0 %v56
    %1754 = vmatmul.f32.gmra.mxu0 %v1736
    %v1755 = vpop.f32.mrf.mxu0
    %v1756 = vadd.f32 %v67, %v1755
    %1757 = vdwg.mxu0
    %v1758 = vadd.f32 %v1710, %v1756
    %v1760 = vsel %vm72, %v1758, 0
    %1762 = vmatpush.msra.mxu0 0.0
    %1763 = vmatpush.msra.mxu0 0.0
    %1764 = vmatpush.msra.mxu0 0.0
    %1765 = vmatpush.msra.mxu0 0.0
    %1766 = vmatpush.msra.mxu0 0.0
    %1767 = vmatpush.msra.mxu0 0.0
    %1768 = vmatpush.msra.mxu0 0.0
    %1769 = vmatpush.msra.mxu0 0.0
    %1770 = vmatpush.msra.mxu0 %v43
    %1771 = vmatpush.msra.mxu0 %v42
    %1772 = vmatpush.msra.mxu0 %v41
    %1773 = vmatpush.msra.mxu0 %v40
    %1774 = vmatpush.msra.mxu0 %v39
    %1775 = vmatpush.msra.mxu0 %v38
    %1776 = vmatpush.msra.mxu0 %v37
    %1777 = vmatpush.msra.mxu0 %v36
    %1778 = vmatmul.f32.gmra.mxu0 %v1760
    %v1779 = vpop.f32.mrf.mxu0
    %v1780 = vadd.f32 %v46, %v1779
    %1781 = vdwg.mxu0
    %v1782 = vtanh.pop %v1780
    %v1784 = vsel %vm72, %v1782, 0
    %1786 = vmatpush.msra.mxu0 0.0
    %1787 = vmatpush.msra.mxu0 0.0
    %1788 = vmatpush.msra.mxu0 0.0
    %1789 = vmatpush.msra.mxu0 0.0
    %1790 = vmatpush.msra.mxu0 0.0
    %1791 = vmatpush.msra.mxu0 0.0
    %1792 = vmatpush.msra.mxu0 0.0
    %1793 = vmatpush.msra.mxu0 0.0
    %1794 = vmatpush.msra.mxu0 %v63
    %1795 = vmatpush.msra.mxu0 %v62
    %1796 = vmatpush.msra.mxu0 %v61
    %1797 = vmatpush.msra.mxu0 %v60
    %1798 = vmatpush.msra.mxu0 %v59
    %1799 = vmatpush.msra.mxu0 %v58
    %1800 = vmatpush.msra.mxu0 %v57
    %1801 = vmatpush.msra.mxu0 %v56
    %1802 = vmatmul.f32.gmra.mxu0 %v1784
    %v1803 = vpop.f32.mrf.mxu0
    %v1804 = vadd.f32 %v67, %v1803
    %1805 = vdwg.mxu0
    %v1806 = vadd.f32 %v1758, %v1804
    %v1808 = vsel %vm72, %v1806, 0
    %1810 = vmatpush.msra.mxu0 0.0
    %1811 = vmatpush.msra.mxu0 0.0
    %1812 = vmatpush.msra.mxu0 0.0
    %1813 = vmatpush.msra.mxu0 0.0
    %1814 = vmatpush.msra.mxu0 0.0
    %1815 = vmatpush.msra.mxu0 0.0
    %1816 = vmatpush.msra.mxu0 0.0
    %1817 = vmatpush.msra.mxu0 0.0
    %1818 = vmatpush.msra.mxu0 %v43
    %1819 = vmatpush.msra.mxu0 %v42
    %1820 = vmatpush.msra.mxu0 %v41
    %1821 = vmatpush.msra.mxu0 %v40
    %1822 = vmatpush.msra.mxu0 %v39
    %1823 = vmatpush.msra.mxu0 %v38
    %1824 = vmatpush.msra.mxu0 %v37
    %1825 = vmatpush.msra.mxu0 %v36
    %1826 = vmatmul.f32.gmra.mxu0 %v1808
    %v1827 = vpop.f32.mrf.mxu0
    %v1828 = vadd.f32 %v46, %v1827
    %1829 = vdwg.mxu0
    %v1830 = vtanh.pop %v1828
    %v1832 = vsel %vm72, %v1830, 0
    %1834 = vmatpush.msra.mxu0 0.0
    %1835 = vmatpush.msra.mxu0 0.0
    %1836 = vmatpush.msra.mxu0 0.0
    %1837 = vmatpush.msra.mxu0 0.0
    %1838 = vmatpush.msra.mxu0 0.0
    %1839 = vmatpush.msra.mxu0 0.0
    %1840 = vmatpush.msra.mxu0 0.0
    %1841 = vmatpush.msra.mxu0 0.0
    %1842 = vmatpush.msra.mxu0 %v63
    %1843 = vmatpush.msra.mxu0 %v62
    %1844 = vmatpush.msra.mxu0 %v61
    %1845 = vmatpush.msra.mxu0 %v60
    %1846 = vmatpush.msra.mxu0 %v59
    %1847 = vmatpush.msra.mxu0 %v58
    %1848 = vmatpush.msra.mxu0 %v57
    %1849 = vmatpush.msra.mxu0 %v56
    %1850 = vmatmul.f32.gmra.mxu0 %v1832
    %v1851 = vpop.f32.mrf.mxu0
    %v1852 = vadd.f32 %v67, %v1851
    %1853 = vdwg.mxu0
    %v1854 = vadd.f32 %v1806, %v1852
    %v1856 = vsel %vm72, %v1854, 0
    %1858 = vmatpush.msra.mxu0 0.0
    %1859 = vmatpush.msra.mxu0 0.0
    %1860 = vmatpush.msra.mxu0 0.0
    %1861 = vmatpush.msra.mxu0 0.0
    %1862 = vmatpush.msra.mxu0 0.0
    %1863 = vmatpush.msra.mxu0 0.0
    %1864 = vmatpush.msra.mxu0 0.0
    %1865 = vmatpush.msra.mxu0 0.0
    %1866 = vmatpush.msra.mxu0 %v43
    %1867 = vmatpush.msra.mxu0 %v42
    %1868 = vmatpush.msra.mxu0 %v41
    %1869 = vmatpush.msra.mxu0 %v40
    %1870 = vmatpush.msra.mxu0 %v39
    %1871 = vmatpush.msra.mxu0 %v38
    %1872 = vmatpush.msra.mxu0 %v37
    %1873 = vmatpush.msra.mxu0 %v36
    %1874 = vmatmul.f32.gmra.mxu0 %v1856
    %v1875 = vpop.f32.mrf.mxu0
    %v1876 = vadd.f32 %v46, %v1875
    %1877 = vdwg.mxu0
    %v1878 = vtanh.pop %v1876
    %v1880 = vsel %vm72, %v1878, 0
    %1882 = vmatpush.msra.mxu0 0.0
    %1883 = vmatpush.msra.mxu0 0.0
    %1884 = vmatpush.msra.mxu0 0.0
    %1885 = vmatpush.msra.mxu0 0.0
    %1886 = vmatpush.msra.mxu0 0.0
    %1887 = vmatpush.msra.mxu0 0.0
    %1888 = vmatpush.msra.mxu0 0.0
    %1889 = vmatpush.msra.mxu0 0.0
    %1890 = vmatpush.msra.mxu0 %v63
    %1891 = vmatpush.msra.mxu0 %v62
    %1892 = vmatpush.msra.mxu0 %v61
    %1893 = vmatpush.msra.mxu0 %v60
    %1894 = vmatpush.msra.mxu0 %v59
    %1895 = vmatpush.msra.mxu0 %v58
    %1896 = vmatpush.msra.mxu0 %v57
    %1897 = vmatpush.msra.mxu0 %v56
    %1898 = vmatmul.f32.gmra.mxu0 %v1880
    %v1899 = vpop.f32.mrf.mxu0
    %v1900 = vadd.f32 %v67, %v1899
    %1901 = vdwg.mxu0
    %v1902 = vadd.f32 %v1854, %v1900
    %v1904 = vsel %vm72, %v1902, 0
    %1906 = vmatpush.msra.mxu0 0.0
    %1907 = vmatpush.msra.mxu0 0.0
    %1908 = vmatpush.msra.mxu0 0.0
    %1909 = vmatpush.msra.mxu0 0.0
    %1910 = vmatpush.msra.mxu0 0.0
    %1911 = vmatpush.msra.mxu0 0.0
    %1912 = vmatpush.msra.mxu0 0.0
    %1913 = vmatpush.msra.mxu0 0.0
    %1914 = vmatpush.msra.mxu0 %v43
    %1915 = vmatpush.msra.mxu0 %v42
    %1916 = vmatpush.msra.mxu0 %v41
    %1917 = vmatpush.msra.mxu0 %v40
    %1918 = vmatpush.msra.mxu0 %v39
    %1919 = vmatpush.msra.mxu0 %v38
    %1920 = vmatpush.msra.mxu0 %v37
    %1921 = vmatpush.msra.mxu0 %v36
    %1922 = vmatmul.f32.gmra.mxu0 %v1904
    %v1923 = vpop.f32.mrf.mxu0
    %v1924 = vadd.f32 %v46, %v1923
    %1925 = vdwg.mxu0
    %v1926 = vtanh.pop %v1924
    %v1928 = vsel %vm72, %v1926, 0
    %1930 = vmatpush.msra.mxu0 0.0
    %1931 = vmatpush.msra.mxu0 0.0
    %1932 = vmatpush.msra.mxu0 0.0
    %1933 = vmatpush.msra.mxu0 0.0
    %1934 = vmatpush.msra.mxu0 0.0
    %1935 = vmatpush.msra.mxu0 0.0
    %1936 = vmatpush.msra.mxu0 0.0
    %1937 = vmatpush.msra.mxu0 0.0
    %1938 = vmatpush.msra.mxu0 %v63
    %1939 = vmatpush.msra.mxu0 %v62
    %1940 = vmatpush.msra.mxu0 %v61
    %1941 = vmatpush.msra.mxu0 %v60
    %1942 = vmatpush.msra.mxu0 %v59
    %1943 = vmatpush.msra.mxu0 %v58
    %1944 = vmatpush.msra.mxu0 %v57
    %1945 = vmatpush.msra.mxu0 %v56
    %1946 = vmatmul.f32.gmra.mxu0 %v1928
    %v1947 = vpop.f32.mrf.mxu0
    %v1948 = vadd.f32 %v67, %v1947
    %1949 = vdwg.mxu0
    %v1950 = vadd.f32 %v1902, %v1948
    %v1952 = vsel %vm72, %v1950, 0
    %1954 = vmatpush.msra.mxu0 0.0
    %1955 = vmatpush.msra.mxu0 0.0
    %1956 = vmatpush.msra.mxu0 0.0
    %1957 = vmatpush.msra.mxu0 0.0
    %1958 = vmatpush.msra.mxu0 0.0
    %1959 = vmatpush.msra.mxu0 0.0
    %1960 = vmatpush.msra.mxu0 0.0
    %1961 = vmatpush.msra.mxu0 0.0
    %1962 = vmatpush.msra.mxu0 %v43
    %1963 = vmatpush.msra.mxu0 %v42
    %1964 = vmatpush.msra.mxu0 %v41
    %1965 = vmatpush.msra.mxu0 %v40
    %1966 = vmatpush.msra.mxu0 %v39
    %1967 = vmatpush.msra.mxu0 %v38
    %1968 = vmatpush.msra.mxu0 %v37
    %1969 = vmatpush.msra.mxu0 %v36
    %1970 = vmatmul.f32.gmra.mxu0 %v1952
    %v1971 = vpop.f32.mrf.mxu0
    %v1972 = vadd.f32 %v46, %v1971
    %1973 = vdwg.mxu0
    %v1974 = vtanh.pop %v1972
    %v1976 = vsel %vm72, %v1974, 0
    %1978 = vmatpush.msra.mxu0 0.0
    %1979 = vmatpush.msra.mxu0 0.0
    %1980 = vmatpush.msra.mxu0 0.0
    %1981 = vmatpush.msra.mxu0 0.0
    %1982 = vmatpush.msra.mxu0 0.0
    %1983 = vmatpush.msra.mxu0 0.0
    %1984 = vmatpush.msra.mxu0 0.0
    %1985 = vmatpush.msra.mxu0 0.0
    %1986 = vmatpush.msra.mxu0 %v63
    %1987 = vmatpush.msra.mxu0 %v62
    %1988 = vmatpush.msra.mxu0 %v61
    %1989 = vmatpush.msra.mxu0 %v60
    %1990 = vmatpush.msra.mxu0 %v59
    %1991 = vmatpush.msra.mxu0 %v58
    %1992 = vmatpush.msra.mxu0 %v57
    %1993 = vmatpush.msra.mxu0 %v56
    %1994 = vmatmul.f32.gmra.mxu0 %v1976
    %v1995 = vpop.f32.mrf.mxu0
    %v1996 = vadd.f32 %v67, %v1995
    %1997 = vdwg.mxu0
    %v1998 = vadd.f32 %v1950, %v1996
    %s1999 = scalar_lea.vmem %s5, 8
    %2000 = vst.msk [vmem:[%s1999] sm:$0x3] %vm70, %v1998
    // Predicated region
    $region26: #{fwd.1} parent=1 // pred_check
      _
    $region27: #{fwd.1} parent=1 // pred_check_branch
      %2002 = sbr.rel (0) target = $region29
    $region28: #{fwd.1} parent=1 // pred_region
      _
    $region29: #{fwd.1} parent=1 // pred_fallthru
      _
    // Predicated region
    $region30: #{fwd.1} parent=1 // pred_check
      _
    $region31: #{fwd.1} parent=1 // pred_check_branch
      %2004 = sbr.rel (0) target = $region33
    $region32: #{fwd.1} parent=1 // pred_region
      _
    $region33: #{fwd.1} parent=1 // pred_fallthru
      _
    %2005 = vsyncpa [#allocation3], 1

</llo_original>
